<compile_context>
chip_gen: v5e
topology: v5e:2x2
jax: 0.10.0
libtpu: 0.0.40
codegen_flags: <defaults>
</compile_context>

<pallas_src>
import functools

import jax
import jax.numpy as jnp
from jax import lax
from jax.experimental import pallas as pl
from jax.experimental.pallas import tpu as pltpu

_EPS = 1e-5
_NEG_SLOPE = 0.01
_VMEM_LIMIT_BYTES = 48 * 1024 * 1024     # safe on v5e/v6e (128 MiB) and v7x (64 MiB)
_TARGET_GEMM_ROWS = 2048                 # amortizes ~0.35 us/grid-step overhead


def _round_up(x, m):
    return (x + m - 1) // m * m


# -----------------------------------------------------------------------------
# Phase 1: conv-as-GEMM from the 4 stride-2 phase planes + per-tile BN partials.
# One grid step = (one image, one tile of TH output rows).
# -----------------------------------------------------------------------------
def _conv_stats_kernel(ee_ref, eeb_ref, eo_ref, eob_ref, oe_ref, oo_ref, w_ref,
                       y_ref, stats_ref, *, th, wo_used, wo, ho, needs_mask):
    tm, c_pad = y_ref.shape
    c = w_ref.shape[1]

    ee = ee_ref[0]                     # (TH, Wo_used+1, C)  even rows / even cols
    eo = eo_ref[0]                     #                     even rows / odd  cols
    oe = oe_ref[0]                     #                     odd  rows / even cols
    oo = oo_ref[0]                     #                     odd  rows / odd  cols
    # Even-row planes shifted down by one output row (the kh == 2 taps):
    # rows [i*TH+1, i*TH+TH] = local rows 1.. of the block ++ the 1-row side input.
    if th > 1:
        ee_n = jnp.concatenate([ee[1:], eeb_ref[0]], axis=0)
        eo_n = jnp.concatenate([eo[1:], eob_ref[0]], axis=0)
    else:
        ee_n = eeb_ref[0]
        eo_n = eob_ref[0]

    def tap(plane, col0):              # (TH, Wo_used, C) -> (TM, C)
        return plane[:, col0:col0 + wo_used, :].reshape(tm, c)

    taps = (
        tap(ee, 0), tap(eo, 0), tap(ee, 1),         # kh = 0, kw = 0 / 1 / 2
        tap(oe, 0), tap(oo, 0), tap(oe, 1),         # kh = 1
        tap(ee_n, 0), tap(eo_n, 0), tap(ee_n, 1),   # kh = 2
    )

    y = jnp.dot(taps[0], w_ref[0], preferred_element_type=jnp.float32)
    for k in range(1, 9):
        y = y + jnp.dot(taps[k], w_ref[k], preferred_element_type=jnp.float32)

    # bf16 intermediate: halves the y round-trip through HBM.
    y_ref[...] = y.astype(y_ref.dtype)

    # Per-tile partial statistics (summed by tiny XLA ops in the wrapper).
    # Rows/cols that only exist because of tile padding are masked out.
    if needs_mask:
        oh = pl.program_id(1) * th + lax.broadcasted_iota(
            jnp.int32, (th, wo_used, c_pad), 0)
        ow = lax.broadcasted_iota(jnp.int32, (th, wo_used, c_pad), 1)
        maskf = jnp.where(jnp.logical_and(oh < ho, ow < wo), 1.0, 0.0)
        y = y * maskf.reshape(tm, c_pad)
    stats_ref[0, 0, 0:1, :] = jnp.sum(y, axis=0, keepdims=True)
    stats_ref[0, 0, 1:2, :] = jnp.sum(y * y, axis=0, keepdims=True)


# -----------------------------------------------------------------------------
# Phase 2: y * scale + shift, then LeakyReLU (scale/shift precomputed).
# -----------------------------------------------------------------------------
def _bn_act_kernel(y_ref, ss_ref, out_ref):
    y = y_ref[...].astype(jnp.float32)
    y = y * ss_ref[0:1, :] + ss_ref[1:2, :]
    out_ref[...] = jnp.where(y >= 0, y, _NEG_SLOPE * y)


@functools.partial(jax.jit, static_argnames=("tile_h", "out_format"))
def downsample_forward(x, weight, gamma, beta, *, tile_h=None, out_format="NCHW"):
    """x: (N, C, H, W); weight: (C, C, 3, 3) OIHW; gamma/beta: (C,)."""
    n, c, h, w = x.shape
    ho = (h - 1) // 2 + 1
    wo = (w - 1) // 2 + 1

    c_pad = _round_up(c, 128)            # lane-dense conv output channels
    wo_used = _round_up(wo, 16)          # keeps in-kernel tap reshapes tile-aligned
    if tile_h is None:
        tile_h = max(1, min(ho, _TARGET_GEMM_ROWS // wo_used))
    th = int(tile_h)
    ho_pad = _round_up(ho, th)
    n_h = ho_pad // th
    tm = th * wo_used                    # GEMM rows per grid step
    m_pad = n * n_h * tm

    # Reflect-pad in NHWC/bf16 and split into the four stride-2 phase planes
    # (even/odd rows x even/odd cols).  This is the only wrapper-side
    # materialization (~1x the input in bf16, vs. the old 9x im2col matrix).
    x_nhwc = jnp.transpose(x.astype(jnp.bfloat16), (0, 2, 3, 1))
    xp = jnp.pad(x_nhwc, ((0, 0), (1, 1), (1, 1), (0, 0)), mode="reflect")

    def phase(r0, c0):
        p = xp[:, r0::2, c0::2, :]
        return jnp.pad(p, ((0, 0), (0, ho_pad + 1 - p.shape[1]),
                           (0, wo_used + 1 - p.shape[2]), (0, 0)))

    ee, eo, oe, oo = phase(0, 0), phase(0, 1), phase(1, 0), phase(1, 1)

    # Per-tap weight matrices: OIHW -> (kh*3+kw, C_in, C_out), bf16, lane-padded.
    w_taps = jnp.transpose(weight.astype(jnp.float32), (2, 3, 1, 0)).reshape(9, c, c)
    w_taps = jnp.pad(w_taps, ((0, 0), (0, 0), (0, c_pad - c))).astype(jnp.bfloat16)

    needs_mask = (ho_pad > ho) or (wo_used > wo)
    a_spec = pl.BlockSpec((1, th, wo_used + 1, c), lambda b, i: (b, i, 0, 0))
    b_spec = pl.BlockSpec((1, 1, wo_used + 1, c), lambda b, i: (b, (i + 1) * th, 0, 0))
    # TODO(synk): for very large C on v7x, single-buffer this grid-invariant
    # block (pipeline_mode=pl.Buffered(1)) and add a K grid axis.
    w_spec = pl.BlockSpec((9, c, c_pad), lambda b, i: (0, 0, 0))

    y, stats_part = pl.pallas_call(
        functools.partial(_conv_stats_kernel, th=th, wo_used=wo_used,
                          wo=wo, ho=ho, needs_mask=needs_mask),
        out_shape=(jax.ShapeDtypeStruct((m_pad, c_pad), jnp.bfloat16),
                   jax.ShapeDtypeStruct((n, n_h, 2, c_pad), jnp.float32)),
        grid=(n, n_h),
        in_specs=[a_spec, b_spec, a_spec, b_spec, a_spec, a_spec, w_spec],
        out_specs=(pl.BlockSpec((tm, c_pad), lambda b, i: (b * n_h + i, 0)),
                   pl.BlockSpec((1, 1, 2, c_pad), lambda b, i: (b, i, 0, 0))),
        compiler_params=pltpu.CompilerParams(
            dimension_semantics=("parallel", "parallel"),   # v7x megacore OK
            vmem_limit_bytes=_VMEM_LIMIT_BYTES),
        cost_estimate=pl.CostEstimate(
            flops=2 * m_pad * 9 * c * c_pad,
            transcendentals=0,
            bytes_accessed=(4 * m_pad * c + 9 * c * c_pad + m_pad * c_pad) * 2
                           + n * n_h * 2 * c_pad * 4),
    )(ee, ee, eo, eo, oe, oo, w_taps)

    # Global training-mode BatchNorm statistics + affine, folded into a single
    # per-channel scale/shift (hoisted out of the per-tile Phase-2 body).
    count = jnp.float32(n * ho * wo)
    stats = jnp.sum(stats_part, axis=(0, 1))            # (2, C_pad)
    mean = stats[0] / count
    var = jnp.maximum(stats[1] / count - mean * mean, 0.0)
    inv_std = lax.rsqrt(var + _EPS)
    gamma_p = jnp.pad(gamma.astype(jnp.float32), (0, c_pad - c))
    beta_p = jnp.pad(beta.astype(jnp.float32), (0, c_pad - c))
    scale = gamma_p * inv_std
    shift = beta_p - mean * scale
    scale_shift = jnp.stack([scale, shift], axis=0)      # (2, C_pad)

    out_flat = pl.pallas_call(
        _bn_act_kernel,
        out_shape=jax.ShapeDtypeStruct((m_pad, c_pad), jnp.float32),
        grid=(n * n_h,),
        in_specs=[pl.BlockSpec((tm, c_pad), lambda i: (i, 0)),
                  pl.BlockSpec((2, c_pad), lambda i: (0, 0))],
        out_specs=pl.BlockSpec((tm, c_pad), lambda i: (i, 0)),
        compiler_params=pltpu.CompilerParams(
            dimension_semantics=("parallel",),
            vmem_limit_bytes=_VMEM_LIMIT_BYTES),
        cost_estimate=pl.CostEstimate(
            flops=4 * m_pad * c_pad, transcendentals=0,
            bytes_accessed=m_pad * c_pad * 6),
    )(y, scale_shift)

    out = out_flat.reshape(n, ho_pad, wo_used, c_pad)[:, :ho, :wo, :c]   # NHWC
    if out_format == "NHWC":
        return out          # lane-dense layout the kernel produces (no transpose)
    return jnp.transpose(out, (0, 3, 1, 2))                              # NCHW


def _reference(x, weight, gamma, beta):
    """Pure-JAX f32 reference matching PyTorch training-mode forward."""
    x_pad = jnp.pad(x, ((0, 0), (0, 0), (1, 1), (1, 1)), mode="reflect")
    y = lax.conv_general_dilated(
        x_pad.astype(jnp.float32), weight.astype(jnp.float32),
        window_strides=(2, 2), padding="VALID",
        dimension_numbers=("NCHW", "OIHW", "NCHW"))
    mean = jnp.mean(y, axis=(0, 2, 3), keepdims=True)
    var = jnp.mean((y - mean) ** 2, axis=(0, 2, 3), keepdims=True)
    y = (y - mean) * lax.rsqrt(var + _EPS)
    y = y * gamma.reshape(1, -1, 1, 1) + beta.reshape(1, -1, 1, 1)
    return jnp.where(y >= 0, y, _NEG_SLOPE * y)


if __name__ == "__main__":
    key = jax.random.PRNGKey(0)
    k_x, k_w, k_g, k_b = jax.random.split(key, 4)

    N, C, H, W = 2, 4, 16, 16
    x = jax.random.normal(k_x, (N, C, H, W), dtype=jnp.float32)
    # Conv2d(C, C, 3) weight: (C_out, C_in, 3, 3), no bias.
    weight = jax.random.normal(k_w, (C, C, 3, 3), dtype=jnp.float32) * 0.1
    # BatchNorm2d affine params (perturbed for a non-trivial deterministic test).
    gamma = 1.0 + 0.1 * jax.random.normal(k_g, (C,), dtype=jnp.float32)
    beta = 0.1 * jax.random.normal(k_b, (C,), dtype=jnp.float32)

    ref = jax.block_until_ready(_reference(x, weight, gamma, beta))

    # Default tiling, plus an awkward tile (tile_h=3) that exercises multi-tile
    # partial statistics and the row/column masking path.
    for th in (None, 3):
        out = jax.block_until_ready(
            downsample_forward(x, weight, gamma, beta, tile_h=th))
        assert out.shape == (N, C, H // 2, W // 2), out.shape
        # bf16 MXU operands (f32 accumulation) vs. an all-f32 reference.
        max_err = float(jnp.max(jnp.abs(out - ref)))
        assert max_err < 5e-2, (th, max_err)
    print("KERNEL_OK")
</pallas_src>

<mosaic_0001>
module attributes {stable_mosaic.version = 11 : i64} {
  func.func @_conv_stats_kernel(%arg0: i32, %arg1: i32, %arg2: memref<1x8x17x4xbf16, #tpu.memory_space<vmem>>, %arg3: memref<1x1x17x4xbf16, #tpu.memory_space<vmem>>, %arg4: memref<1x8x17x4xbf16, #tpu.memory_space<vmem>>, %arg5: memref<1x1x17x4xbf16, #tpu.memory_space<vmem>>, %arg6: memref<1x8x17x4xbf16, #tpu.memory_space<vmem>>, %arg7: memref<1x8x17x4xbf16, #tpu.memory_space<vmem>>, %arg8: memref<9x4x128xbf16, #tpu.memory_space<vmem>>, %arg9: memref<128x128xbf16, #tpu.memory_space<vmem>>, %arg10: memref<1x1x2x128xf32, #tpu.memory_space<vmem>>) attributes {dimension_semantics = [#tpu.dimension_semantics<parallel>, #tpu.dimension_semantics<parallel>], iteration_bounds = array<i64: 2, 1>, scalar_prefetch = 0 : i64, scratch_operands = 0 : i64, tpu.core_type = #tpu.core_type<tc>, window_params = [{transform_indices = @transform_0, window_bounds = array<i64: 1, 8, 17, 4>}, {transform_indices = @transform_1, window_bounds = array<i64: 1, 1, 17, 4>}, {transform_indices = @transform_2, window_bounds = array<i64: 1, 8, 17, 4>}, {transform_indices = @transform_3, window_bounds = array<i64: 1, 1, 17, 4>}, {transform_indices = @transform_4, window_bounds = array<i64: 1, 8, 17, 4>}, {transform_indices = @transform_5, window_bounds = array<i64: 1, 8, 17, 4>}, {pipeline_mode = #tpu.pipeline_mode<synchronous>, transform_indices = @transform_6, window_bounds = array<i64: 9, 4, 128>}, {transform_indices = @transform_7, window_bounds = array<i64: 128, 128>}, {transform_indices = @transform_8, window_bounds = array<i64: 1, 1, 2, 128>}]} {
    %c0 = arith.constant 0 : index
    %c0_0 = arith.constant 0 : index
    %c0_1 = arith.constant 0 : index
    %c0_2 = arith.constant 0 : index
    %0 = vector.load %arg2[%c0, %c0_0, %c0_1, %c0_2] : memref<1x8x17x4xbf16, #tpu.memory_space<vmem>>, vector<1x8x17x4xbf16>
    %1 = vector.shape_cast %0 : vector<1x8x17x4xbf16> to vector<8x17x4xbf16>
    %c0_3 = arith.constant 0 : index
    %c0_4 = arith.constant 0 : index
    %c0_5 = arith.constant 0 : index
    %c0_6 = arith.constant 0 : index
    %2 = vector.load %arg4[%c0_3, %c0_4, %c0_5, %c0_6] : memref<1x8x17x4xbf16, #tpu.memory_space<vmem>>, vector<1x8x17x4xbf16>
    %3 = vector.shape_cast %2 : vector<1x8x17x4xbf16> to vector<8x17x4xbf16>
    %c0_7 = arith.constant 0 : index
    %c0_8 = arith.constant 0 : index
    %c0_9 = arith.constant 0 : index
    %c0_10 = arith.constant 0 : index
    %4 = vector.load %arg6[%c0_7, %c0_8, %c0_9, %c0_10] : memref<1x8x17x4xbf16, #tpu.memory_space<vmem>>, vector<1x8x17x4xbf16>
    %5 = vector.shape_cast %4 : vector<1x8x17x4xbf16> to vector<8x17x4xbf16>
    %c0_11 = arith.constant 0 : index
    %c0_12 = arith.constant 0 : index
    %c0_13 = arith.constant 0 : index
    %c0_14 = arith.constant 0 : index
    %6 = vector.load %arg7[%c0_11, %c0_12, %c0_13, %c0_14] : memref<1x8x17x4xbf16, #tpu.memory_space<vmem>>, vector<1x8x17x4xbf16>
    %7 = vector.shape_cast %6 : vector<1x8x17x4xbf16> to vector<8x17x4xbf16>
    %8 = vector.extract_strided_slice %1 {offsets = [1, 0, 0], sizes = [7, 17, 4], strides = [1, 1, 1]} : vector<8x17x4xbf16> to vector<7x17x4xbf16>
    %c0_15 = arith.constant 0 : index
    %c0_16 = arith.constant 0 : index
    %c0_17 = arith.constant 0 : index
    %c0_18 = arith.constant 0 : index
    %9 = vector.load %arg3[%c0_15, %c0_16, %c0_17, %c0_18] : memref<1x1x17x4xbf16, #tpu.memory_space<vmem>>, vector<1x1x17x4xbf16>
    %10 = vector.shape_cast %9 : vector<1x1x17x4xbf16> to vector<1x17x4xbf16>
    %11 = tpu.concatenate %8, %10 in 0 : vector<7x17x4xbf16>, vector<1x17x4xbf16> -> vector<8x17x4xbf16>
    %12 = vector.extract_strided_slice %3 {offsets = [1, 0, 0], sizes = [7, 17, 4], strides = [1, 1, 1]} : vector<8x17x4xbf16> to vector<7x17x4xbf16>
    %c0_19 = arith.constant 0 : index
    %c0_20 = arith.constant 0 : index
    %c0_21 = arith.constant 0 : index
    %c0_22 = arith.constant 0 : index
    %13 = vector.load %arg5[%c0_19, %c0_20, %c0_21, %c0_22] : memref<1x1x17x4xbf16, #tpu.memory_space<vmem>>, vector<1x1x17x4xbf16>
    %14 = vector.shape_cast %13 : vector<1x1x17x4xbf16> to vector<1x17x4xbf16>
    %15 = tpu.concatenate %12, %14 in 0 : vector<7x17x4xbf16>, vector<1x17x4xbf16> -> vector<8x17x4xbf16>
    %16 = vector.extract_strided_slice %1 {offsets = [0, 0, 0], sizes = [8, 16, 4], strides = [1, 1, 1]} : vector<8x17x4xbf16> to vector<8x16x4xbf16>
    %17 = vector.shape_cast %16 : vector<8x16x4xbf16> to vector<128x4xbf16>
    %18 = vector.extract_strided_slice %3 {offsets = [0, 0, 0], sizes = [8, 16, 4], strides = [1, 1, 1]} : vector<8x17x4xbf16> to vector<8x16x4xbf16>
    %19 = vector.shape_cast %18 : vector<8x16x4xbf16> to vector<128x4xbf16>
    %20 = vector.extract_strided_slice %1 {offsets = [0, 1, 0], sizes = [8, 16, 4], strides = [1, 1, 1]} : vector<8x17x4xbf16> to vector<8x16x4xbf16>
    %21 = vector.shape_cast %20 : vector<8x16x4xbf16> to vector<128x4xbf16>
    %22 = vector.extract_strided_slice %5 {offsets = [0, 0, 0], sizes = [8, 16, 4], strides = [1, 1, 1]} : vector<8x17x4xbf16> to vector<8x16x4xbf16>
    %23 = vector.shape_cast %22 : vector<8x16x4xbf16> to vector<128x4xbf16>
    %24 = vector.extract_strided_slice %7 {offsets = [0, 0, 0], sizes = [8, 16, 4], strides = [1, 1, 1]} : vector<8x17x4xbf16> to vector<8x16x4xbf16>
    %25 = vector.shape_cast %24 : vector<8x16x4xbf16> to vector<128x4xbf16>
    %26 = vector.extract_strided_slice %5 {offsets = [0, 1, 0], sizes = [8, 16, 4], strides = [1, 1, 1]} : vector<8x17x4xbf16> to vector<8x16x4xbf16>
    %27 = vector.shape_cast %26 : vector<8x16x4xbf16> to vector<128x4xbf16>
    %28 = vector.extract_strided_slice %11 {offsets = [0, 0, 0], sizes = [8, 16, 4], strides = [1, 1, 1]} : vector<8x17x4xbf16> to vector<8x16x4xbf16>
    %29 = vector.shape_cast %28 : vector<8x16x4xbf16> to vector<128x4xbf16>
    %30 = vector.extract_strided_slice %15 {offsets = [0, 0, 0], sizes = [8, 16, 4], strides = [1, 1, 1]} : vector<8x17x4xbf16> to vector<8x16x4xbf16>
    %31 = vector.shape_cast %30 : vector<8x16x4xbf16> to vector<128x4xbf16>
    %32 = vector.extract_strided_slice %11 {offsets = [0, 1, 0], sizes = [8, 16, 4], strides = [1, 1, 1]} : vector<8x17x4xbf16> to vector<8x16x4xbf16>
    %33 = vector.shape_cast %32 : vector<8x16x4xbf16> to vector<128x4xbf16>
    %c0_23 = arith.constant 0 : index
    %c0_24 = arith.constant 0 : index
    %c0_25 = arith.constant 0 : index
    %34 = vector.load %arg8[%c0_23, %c0_24, %c0_25] : memref<9x4x128xbf16, #tpu.memory_space<vmem>>, vector<1x4x128xbf16>
    %35 = vector.shape_cast %34 : vector<1x4x128xbf16> to vector<4x128xbf16>
    %cst = arith.constant dense<0.000000e+00> : vector<128x128xf32>
    %36 = tpu.matmul %17, %35, %cst {dimension_numbers = #tpu.dot_dimension_numbers<[1], [0], [0], [1], [0, 0, 1, 1], [], []>} : vector<128x4xbf16>, vector<4x128xbf16>, vector<128x128xf32> -> vector<128x128xf32>
    %c1 = arith.constant 1 : index
    %c0_26 = arith.constant 0 : index
    %c0_27 = arith.constant 0 : index
    %37 = vector.load %arg8[%c1, %c0_26, %c0_27] : memref<9x4x128xbf16, #tpu.memory_space<vmem>>, vector<1x4x128xbf16>
    %38 = vector.shape_cast %37 : vector<1x4x128xbf16> to vector<4x128xbf16>
    %cst_28 = arith.constant dense<0.000000e+00> : vector<128x128xf32>
    %39 = tpu.matmul %19, %38, %cst_28 {dimension_numbers = #tpu.dot_dimension_numbers<[1], [0], [0], [1], [0, 0, 1, 1], [], []>} : vector<128x4xbf16>, vector<4x128xbf16>, vector<128x128xf32> -> vector<128x128xf32>
    %40 = arith.addf %36, %39 : vector<128x128xf32>
    %c2 = arith.constant 2 : index
    %c0_29 = arith.constant 0 : index
    %c0_30 = arith.constant 0 : index
    %41 = vector.load %arg8[%c2, %c0_29, %c0_30] : memref<9x4x128xbf16, #tpu.memory_space<vmem>>, vector<1x4x128xbf16>
    %42 = vector.shape_cast %41 : vector<1x4x128xbf16> to vector<4x128xbf16>
    %cst_31 = arith.constant dense<0.000000e+00> : vector<128x128xf32>
    %43 = tpu.matmul %21, %42, %cst_31 {dimension_numbers = #tpu.dot_dimension_numbers<[1], [0], [0], [1], [0, 0, 1, 1], [], []>} : vector<128x4xbf16>, vector<4x128xbf16>, vector<128x128xf32> -> vector<128x128xf32>
    %44 = arith.addf %40, %43 : vector<128x128xf32>
    %c3 = arith.constant 3 : index
    %c0_32 = arith.constant 0 : index
    %c0_33 = arith.constant 0 : index
    %45 = vector.load %arg8[%c3, %c0_32, %c0_33] : memref<9x4x128xbf16, #tpu.memory_space<vmem>>, vector<1x4x128xbf16>
    %46 = vector.shape_cast %45 : vector<1x4x128xbf16> to vector<4x128xbf16>
    %cst_34 = arith.constant dense<0.000000e+00> : vector<128x128xf32>
    %47 = tpu.matmul %23, %46, %cst_34 {dimension_numbers = #tpu.dot_dimension_numbers<[1], [0], [0], [1], [0, 0, 1, 1], [], []>} : vector<128x4xbf16>, vector<4x128xbf16>, vector<128x128xf32> -> vector<128x128xf32>
    %48 = arith.addf %44, %47 : vector<128x128xf32>
    %c4 = arith.constant 4 : index
    %c0_35 = arith.constant 0 : index
    %c0_36 = arith.constant 0 : index
    %49 = vector.load %arg8[%c4, %c0_35, %c0_36] : memref<9x4x128xbf16, #tpu.memory_space<vmem>>, vector<1x4x128xbf16>
    %50 = vector.shape_cast %49 : vector<1x4x128xbf16> to vector<4x128xbf16>
    %cst_37 = arith.constant dense<0.000000e+00> : vector<128x128xf32>
    %51 = tpu.matmul %25, %50, %cst_37 {dimension_numbers = #tpu.dot_dimension_numbers<[1], [0], [0], [1], [0, 0, 1, 1], [], []>} : vector<128x4xbf16>, vector<4x128xbf16>, vector<128x128xf32> -> vector<128x128xf32>
    %52 = arith.addf %48, %51 : vector<128x128xf32>
    %c5 = arith.constant 5 : index
    %c0_38 = arith.constant 0 : index
    %c0_39 = arith.constant 0 : index
    %53 = vector.load %arg8[%c5, %c0_38, %c0_39] : memref<9x4x128xbf16, #tpu.memory_space<vmem>>, vector<1x4x128xbf16>
    %54 = vector.shape_cast %53 : vector<1x4x128xbf16> to vector<4x128xbf16>
    %cst_40 = arith.constant dense<0.000000e+00> : vector<128x128xf32>
    %55 = tpu.matmul %27, %54, %cst_40 {dimension_numbers = #tpu.dot_dimension_numbers<[1], [0], [0], [1], [0, 0, 1, 1], [], []>} : vector<128x4xbf16>, vector<4x128xbf16>, vector<128x128xf32> -> vector<128x128xf32>
    %56 = arith.addf %52, %55 : vector<128x128xf32>
    %c6 = arith.constant 6 : index
    %c0_41 = arith.constant 0 : index
    %c0_42 = arith.constant 0 : index
    %57 = vector.load %arg8[%c6, %c0_41, %c0_42] : memref<9x4x128xbf16, #tpu.memory_space<vmem>>, vector<1x4x128xbf16>
    %58 = vector.shape_cast %57 : vector<1x4x128xbf16> to vector<4x128xbf16>
    %cst_43 = arith.constant dense<0.000000e+00> : vector<128x128xf32>
    %59 = tpu.matmul %29, %58, %cst_43 {dimension_numbers = #tpu.dot_dimension_numbers<[1], [0], [0], [1], [0, 0, 1, 1], [], []>} : vector<128x4xbf16>, vector<4x128xbf16>, vector<128x128xf32> -> vector<128x128xf32>
    %60 = arith.addf %56, %59 : vector<128x128xf32>
    %c7 = arith.constant 7 : index
    %c0_44 = arith.constant 0 : index
    %c0_45 = arith.constant 0 : index
    %61 = vector.load %arg8[%c7, %c0_44, %c0_45] : memref<9x4x128xbf16, #tpu.memory_space<vmem>>, vector<1x4x128xbf16>
    %62 = vector.shape_cast %61 : vector<1x4x128xbf16> to vector<4x128xbf16>
    %cst_46 = arith.constant dense<0.000000e+00> : vector<128x128xf32>
    %63 = tpu.matmul %31, %62, %cst_46 {dimension_numbers = #tpu.dot_dimension_numbers<[1], [0], [0], [1], [0, 0, 1, 1], [], []>} : vector<128x4xbf16>, vector<4x128xbf16>, vector<128x128xf32> -> vector<128x128xf32>
    %64 = arith.addf %60, %63 : vector<128x128xf32>
    %c8 = arith.constant 8 : index
    %c0_47 = arith.constant 0 : index
    %c0_48 = arith.constant 0 : index
    %65 = vector.load %arg8[%c8, %c0_47, %c0_48] : memref<9x4x128xbf16, #tpu.memory_space<vmem>>, vector<1x4x128xbf16>
    %66 = vector.shape_cast %65 : vector<1x4x128xbf16> to vector<4x128xbf16>
    %cst_49 = arith.constant dense<0.000000e+00> : vector<128x128xf32>
    %67 = tpu.matmul %33, %66, %cst_49 {dimension_numbers = #tpu.dot_dimension_numbers<[1], [0], [0], [1], [0, 0, 1, 1], [], []>} : vector<128x4xbf16>, vector<4x128xbf16>, vector<128x128xf32> -> vector<128x128xf32>
    %68 = arith.addf %64, %67 : vector<128x128xf32>
    %69 = arith.truncf %68 : vector<128x128xf32> to vector<128x128xbf16>
    %c0_50 = arith.constant 0 : index
    %c0_51 = arith.constant 0 : index
    %70 = vector.load %arg9[%c0_50, %c0_51] : memref<128x128xbf16, #tpu.memory_space<vmem>>, vector<128x128xbf16>
    tpu.vector_store %arg9[%c0_50, %c0_51], %69 {strides = array<i32>} : memref<128x128xbf16, #tpu.memory_space<vmem>>, vector<128x128xbf16>,
    %c8_i32 = arith.constant 8 : i32
    %71 = arith.muli %arg1, %c8_i32 : i32
    %72 = tpu.iota {dimensions = array<i32: 0>} : vector<8x16x128xi32>
    %73 = vector.broadcast %71 : i32 to vector<8x16x128xi32>
    %74 = arith.addi %73, %72 : vector<8x16x128xi32>
    %75 = tpu.iota {dimensions = array<i32: 1>} : vector<8x16x128xi32>
    %c8_i32_52 = arith.constant 8 : i32
    %76 = vector.broadcast %c8_i32_52 : i32 to vector<8x16x128xi32>
    %77 = arith.cmpi slt, %74, %76 : vector<8x16x128xi32>
    %c8_i32_53 = arith.constant 8 : i32
    %78 = vector.broadcast %c8_i32_53 : i32 to vector<8x16x128xi32>
    %79 = arith.cmpi slt, %75, %78 : vector<8x16x128xi32>
    %80 = arith.andi %77, %79 : vector<8x16x128xi1>
    %cst_54 = arith.constant 1.000000e+00 : f32
    %cst_55 = arith.constant 0.000000e+00 : f32
    %81 = vector.broadcast %cst_54 : f32 to vector<8x16x128xf32>
    %82 = vector.broadcast %cst_55 : f32 to vector<8x16x128xf32>
    %83 = arith.select %80, %81, %82 : vector<8x16x128xi1>, vector<8x16x128xf32>
    %84 = vector.shape_cast %83 : vector<8x16x128xf32> to vector<128x128xf32>
    %85 = arith.mulf %68, %84 : vector<128x128xf32>
    %cst_56 = arith.constant dense<0.000000e+00> : vector<128xf32>
    %86 = vector.multi_reduction <add>, %85, %cst_56 [0] : vector<128x128xf32> to vector<128xf32>
    %87 = vector.shape_cast %86 : vector<128xf32> to vector<1x128xf32>
    %c0_57 = arith.constant 0 : index
    %c0_58 = arith.constant 0 : index
    %c0_59 = arith.constant 0 : index
    %c0_60 = arith.constant 0 : index
    %88 = vector.load %arg10[%c0_57, %c0_58, %c0_59, %c0_60] : memref<1x1x2x128xf32, #tpu.memory_space<vmem>>, vector<1x1x1x128xf32>
    %89 = vector.shape_cast %88 : vector<1x1x1x128xf32> to vector<1x128xf32>
    %90 = vector.shape_cast %87 : vector<1x128xf32> to vector<1x1x1x128xf32>
    tpu.vector_store %arg10[%c0_57, %c0_58, %c0_59, %c0_60], %90 {strides = array<i32>} : memref<1x1x2x128xf32, #tpu.memory_space<vmem>>, vector<1x1x1x128xf32>,
    %91 = arith.mulf %85, %85 : vector<128x128xf32>
    %cst_61 = arith.constant dense<0.000000e+00> : vector<128xf32>
    %92 = vector.multi_reduction <add>, %91, %cst_61 [0] : vector<128x128xf32> to vector<128xf32>
    %93 = vector.shape_cast %92 : vector<128xf32> to vector<1x128xf32>
    %c0_62 = arith.constant 0 : index
    %c0_63 = arith.constant 0 : index
    %c1_64 = arith.constant 1 : index
    %c0_65 = arith.constant 0 : index
    %94 = vector.load %arg10[%c0_62, %c0_63, %c1_64, %c0_65] : memref<1x1x2x128xf32, #tpu.memory_space<vmem>>, vector<1x1x1x128xf32>
    %95 = vector.shape_cast %94 : vector<1x1x1x128xf32> to vector<1x128xf32>
    %96 = vector.shape_cast %93 : vector<1x128xf32> to vector<1x1x1x128xf32>
    tpu.vector_store %arg10[%c0_62, %c0_63, %c1_64, %c0_65], %96 {strides = array<i32>} : memref<1x1x2x128xf32, #tpu.memory_space<vmem>>, vector<1x1x1x128xf32>,
    return
  }
  func.func @transform_0(%arg0: i32, %arg1: i32) -> (i32, i32, i32, i32) {
    %c0_i32 = arith.constant 0 : i32
    %c0_i32_0 = arith.constant 0 : i32
    %c0_i32_1 = arith.constant 0 : i32
    return %arg0, %arg1, %c0_i32, %c0_i32_0 : i32, i32, i32, i32
  }
  func.func @transform_1(%arg0: i32, %arg1: i32) -> (i32, i32, i32, i32) {
    %c1_i32 = arith.constant 1 : i32
    %0 = arith.addi %arg1, %c1_i32 : i32
    %c8_i32 = arith.constant 8 : i32
    %1 = arith.muli %0, %c8_i32 : i32
    %c0_i32 = arith.constant 0 : i32
    %c0_i32_0 = arith.constant 0 : i32
    %c0_i32_1 = arith.constant 0 : i32
    return %arg0, %1, %c0_i32, %c0_i32_0 : i32, i32, i32, i32
  }
  func.func @transform_2(%arg0: i32, %arg1: i32) -> (i32, i32, i32, i32) {
    %c0_i32 = arith.constant 0 : i32
    %c0_i32_0 = arith.constant 0 : i32
    %c0_i32_1 = arith.constant 0 : i32
    return %arg0, %arg1, %c0_i32, %c0_i32_0 : i32, i32, i32, i32
  }
  func.func @transform_3(%arg0: i32, %arg1: i32) -> (i32, i32, i32, i32) {
    %c1_i32 = arith.constant 1 : i32
    %0 = arith.addi %arg1, %c1_i32 : i32
    %c8_i32 = arith.constant 8 : i32
    %1 = arith.muli %0, %c8_i32 : i32
    %c0_i32 = arith.constant 0 : i32
    %c0_i32_0 = arith.constant 0 : i32
    %c0_i32_1 = arith.constant 0 : i32
    return %arg0, %1, %c0_i32, %c0_i32_0 : i32, i32, i32, i32
  }
  func.func @transform_4(%arg0: i32, %arg1: i32) -> (i32, i32, i32, i32) {
    %c0_i32 = arith.constant 0 : i32
    %c0_i32_0 = arith.constant 0 : i32
    %c0_i32_1 = arith.constant 0 : i32
    return %arg0, %arg1, %c0_i32, %c0_i32_0 : i32, i32, i32, i32
  }
  func.func @transform_5(%arg0: i32, %arg1: i32) -> (i32, i32, i32, i32) {
    %c0_i32 = arith.constant 0 : i32
    %c0_i32_0 = arith.constant 0 : i32
    %c0_i32_1 = arith.constant 0 : i32
    return %arg0, %arg1, %c0_i32, %c0_i32_0 : i32, i32, i32, i32
  }
  func.func @transform_6(%arg0: i32, %arg1: i32) -> (i32, i32, i32) {
    %c0_i32 = arith.constant 0 : i32
    %c0_i32_0 = arith.constant 0 : i32
    %c0_i32_1 = arith.constant 0 : i32
    %c0_i32_2 = arith.constant 0 : i32
    return %c0_i32, %c0_i32_0, %c0_i32_1 : i32, i32, i32
  }
  func.func @transform_7(%arg0: i32, %arg1: i32) -> (i32, i32) {
    %c1_i32 = arith.constant 1 : i32
    %0 = arith.muli %arg0, %c1_i32 : i32
    %1 = arith.addi %0, %arg1 : i32
    %c0_i32 = arith.constant 0 : i32
    %c0_i32_0 = arith.constant 0 : i32
    return %1, %c0_i32 : i32, i32
  }
  func.func @transform_8(%arg0: i32, %arg1: i32) -> (i32, i32, i32, i32) {
    %c0_i32 = arith.constant 0 : i32
    %c0_i32_0 = arith.constant 0 : i32
    %c0_i32_1 = arith.constant 0 : i32
    return %arg0, %arg1, %c0_i32, %c0_i32_0 : i32, i32, i32, i32
  }
}

module attributes {stable_mosaic.version = 11 : i64} {
  func.func @_bn_act_kernel(%arg0: i32, %arg1: memref<128x128xbf16, #tpu.memory_space<vmem>>, %arg2: memref<2x128xf32, #tpu.memory_space<vmem>>, %arg3: memref<128x128xf32, #tpu.memory_space<vmem>>) attributes {dimension_semantics = [#tpu.dimension_semantics<parallel>], iteration_bounds = array<i64: 2>, scalar_prefetch = 0 : i64, scratch_operands = 0 : i64, tpu.core_type = #tpu.core_type<tc>, window_params = [{transform_indices = @transform_0, window_bounds = array<i64: 128, 128>}, {pipeline_mode = #tpu.pipeline_mode<synchronous>, transform_indices = @transform_1, window_bounds = array<i64: 2, 128>}, {transform_indices = @transform_2, window_bounds = array<i64: 128, 128>}]} {
    %c0 = arith.constant 0 : index
    %c0_0 = arith.constant 0 : index
    %0 = vector.load %arg1[%c0, %c0_0] : memref<128x128xbf16, #tpu.memory_space<vmem>>, vector<128x128xbf16>
    %1 = arith.extf %0 : vector<128x128xbf16> to vector<128x128xf32>
    %c0_1 = arith.constant 0 : index
    %c0_2 = arith.constant 0 : index
    %2 = vector.load %arg2[%c0_1, %c0_2] : memref<2x128xf32, #tpu.memory_space<vmem>>, vector<1x128xf32>
    %3 = vector.broadcast %2 : vector<1x128xf32> to vector<128x128xf32>
    %4 = arith.mulf %1, %3 : vector<128x128xf32>
    %c1 = arith.constant 1 : index
    %c0_3 = arith.constant 0 : index
    %5 = vector.load %arg2[%c1, %c0_3] : memref<2x128xf32, #tpu.memory_space<vmem>>, vector<1x128xf32>
    %6 = vector.broadcast %5 : vector<1x128xf32> to vector<128x128xf32>
    %7 = arith.addf %4, %6 : vector<128x128xf32>
    %cst = arith.constant 0.000000e+00 : f32
    %8 = vector.broadcast %cst : f32 to vector<128x128xf32>
    %9 = arith.cmpf oge, %7, %8 : vector<128x128xf32>
    %cst_4 = arith.constant 0.00999999977 : f32
    %10 = vector.broadcast %cst_4 : f32 to vector<128x128xf32>
    %11 = arith.mulf %10, %7 : vector<128x128xf32>
    %12 = arith.select %9, %7, %11 : vector<128x128xi1>, vector<128x128xf32>
    %c0_5 = arith.constant 0 : index
    %c0_6 = arith.constant 0 : index
    %13 = vector.load %arg3[%c0_5, %c0_6] : memref<128x128xf32, #tpu.memory_space<vmem>>, vector<128x128xf32>
    tpu.vector_store %arg3[%c0_5, %c0_6], %12 {strides = array<i32>} : memref<128x128xf32, #tpu.memory_space<vmem>>, vector<128x128xf32>,
    return
  }
  func.func @transform_0(%arg0: i32) -> (i32, i32) {
    %c0_i32 = arith.constant 0 : i32
    %c0_i32_0 = arith.constant 0 : i32
    return %arg0, %c0_i32 : i32, i32
  }
  func.func @transform_1(%arg0: i32) -> (i32, i32) {
    %c0_i32 = arith.constant 0 : i32
    %c0_i32_0 = arith.constant 0 : i32
    %c0_i32_1 = arith.constant 0 : i32
    return %c0_i32, %c0_i32_0 : i32, i32
  }
  func.func @transform_2(%arg0: i32) -> (i32, i32) {
    %c0_i32 = arith.constant 0 : i32
    %c0_i32_0 = arith.constant 0 : i32
    return %arg0, %c0_i32 : i32, i32
  }
}

</mosaic_0001>

<llo_original>
// kernel: downsample_forward.3
$region0: #{downsample_forward.3}
  #allocation0 [shape = 'u32[]', space=smem, size = 0x4, offset = 0x4, fixed_abs, tag = 'smem constant byte address 0x4 - core index']
  #allocation1 [shape = 'u32[72,128]{1,0:T(1,128)}', space=vmem, size = 0x9000, scoped, tag = 'internal scratch']
  %s0 = inlined_call_operand.vmem [shape: bf16[256,128], index: 0, kind: input, shape index: {}]
  %s1 = inlined_call_operand.vmem [shape: f32[2,128], index: 1, kind: input, shape index: {}]
  %s2 = inlined_call_operand.vmem [shape: f32[256,128], index: 2, kind: output, shape index: {}]
  %s3 = sld [smem:[#allocation0]]
  $region41: #{downsample_forward.3} parent=0
    _
  %s5 = ssub.s32 1, %s3
  %s6 = scalar_select 0, %s5, %s3
  loop: start=0, step=1, limit=4
  $region2: #{downsample_forward.3} parent=0 // loop_pre_header
    _
  $region3: #{downsample_forward.3} parent=0 // loop_header
    %s8 = sphi 0, %s12
    %p9 = scmp.ge.s32.totalorder %s8, 4
    %s18 = sphi 0, %s20
    %s21 = sphi 0, %s18
    %s22 = sphi 0, %s21
    %s38 = sphi 0, %s22
    %s42 = sphi 0, %s42
    %s44 = sphi 0, %s42
    %s45 = sphi 0, %s44
    %s59 = sphi 0, %s45
    %s65 = sphi 0, %s67
    %s68 = sphi 0, %s65
    %s69 = sphi 0, %s68
    %s85 = sphi 0, %s69
  $region4: #{downsample_forward.3} parent=0 // loop_header_branch
    %11 = sbr.rel (%p9) target = $region8
  $region5: #{downsample_forward.3} parent=0 // loop_body
    %s13 = ssub.s32 %s8, 1
    %s14 = ssub.s32 %s8, 2
    %s15 = sadd.s32 %s8, 1
    %s16 = ssub.s32 %s8, %s15
    %p17 = scmp.eq.s32.totalorder %s16, 0
    %s19 = sadd.s32 %s18, 1
    %s20 = scalar_select %p17, %s18, %s19
    %p23 = pneg %p17
    %p24 = scmp.eq.s32.totalorder %s8, 1
    %p25 = por %p23, %p24
    %p26 = scmp.ne.s32.totalorder %s18, %s21
    %p27 = scmp.eq.s32.totalorder %s8, 0
    %p28 = por %p26, %p27
    %p29 = scmp.ne.s32.totalorder %s18, %s21
    %p30 = scmp.eq.s32.totalorder %s13, 1
    %p31 = por %p29, %p30
    %p32 = scmp.ne.s32.totalorder %s21, %s22
    %p33 = scmp.eq.s32.totalorder %s13, 0
    %p34 = por %p32, %p33
    %p35 = scmp.ne.s32.totalorder %s21, %s22
    %p36 = scmp.eq.s32.totalorder %s14, 1
    %p37 = por %p35, %p36
    %p39 = scmp.ne.s32.totalorder %s22, %s38
    %p40 = scmp.eq.s32.totalorder %s14, 0
    %p41 = por %p39, %p40
    %s43 = sadd.s32 %s42, 1
    %p46 = scmp.eq.s32.totalorder %s8, 1
    %p47 = scmp.ne.s32.totalorder %s42, %s44
    %p48 = scmp.eq.s32.totalorder %s8, 0
    %p49 = por %p47, %p48
    %p50 = scmp.ne.s32.totalorder %s42, %s44
    %p51 = scmp.eq.s32.totalorder %s13, 1
    %p52 = por %p50, %p51
    %p53 = scmp.ne.s32.totalorder %s44, %s45
    %p54 = scmp.eq.s32.totalorder %s13, 0
    %p55 = por %p53, %p54
    %p56 = scmp.ne.s32.totalorder %s44, %s45
    %p57 = scmp.eq.s32.totalorder %s14, 1
    %p58 = por %p56, %p57
    %p60 = scmp.ne.s32.totalorder %s45, %s59
    %p61 = scmp.eq.s32.totalorder %s14, 0
    %p62 = por %p60, %p61
    %s63 = ssub.s32 %s8, %s15
    %p64 = scmp.eq.s32.totalorder %s63, 0
    %s66 = sadd.s32 %s65, 1
    %s67 = scalar_select %p64, %s65, %s66
    %p70 = pneg %p64
    %p71 = scmp.eq.s32.totalorder %s8, 1
    %p72 = por %p70, %p71
    %p73 = scmp.ne.s32.totalorder %s65, %s68
    %p74 = scmp.eq.s32.totalorder %s8, 0
    %p75 = por %p73, %p74
    %p76 = scmp.ne.s32.totalorder %s65, %s68
    %p77 = scmp.eq.s32.totalorder %s13, 1
    %p78 = por %p76, %p77
    %p79 = scmp.ne.s32.totalorder %s68, %s69
    %p80 = scmp.eq.s32.totalorder %s13, 0
    %p81 = por %p79, %p80
    %p82 = scmp.ne.s32.totalorder %s68, %s69
    %p83 = scmp.eq.s32.totalorder %s14, 1
    %p84 = por %p82, %p83
    %p86 = scmp.ne.s32.totalorder %s69, %s85
    %p87 = scmp.eq.s32.totalorder %s14, 0
    %p88 = por %p86, %p87
    %p89 = scmp.le.s32.totalorder 1, %s8
    %p90 = scmp.lt.s32.totalorder %s8, 3
    %p91 = pnand %p89, %p90
    %p92 = pneg %p91
    // Predicated region
    $region9: #{downsample_forward.3} parent=5 // pred_check
      _
    $region10: #{downsample_forward.3} parent=5 // pred_check_branch
      %94 = sbr.rel (%p91) target = $region12
    $region11: #{downsample_forward.3} parent=5 // pred_region
      %s95 = ssub.s32 %s8, 1
      // Predicated region
      $region13: #{downsample_forward.3} parent=11 // pred_check
        %p96 = pneg %p55
      $region14: #{downsample_forward.3} parent=11 // pred_check_branch
        %98 = sbr.rel (%p96) target = $region16
      $region15: #{downsample_forward.3} parent=11 // pred_region
        _
      $region16: #{downsample_forward.3} parent=11 // pred_fallthru
        _
    $region12: #{downsample_forward.3} parent=5 // pred_fallthru
      _
    %p99 = scmp.lt.s32.totalorder %s8, 2
    // Predicated region
    $region17: #{downsample_forward.3} parent=5 // pred_check
      %p100 = pneg %p99
    $region18: #{downsample_forward.3} parent=5 // pred_check_branch
      %102 = sbr.rel (%p100) target = $region20
    $region19: #{downsample_forward.3} parent=5 // pred_region
      // Predicated region
      $region21: #{downsample_forward.3} parent=19 // pred_check
        %p103 = pneg %p28
      $region22: #{downsample_forward.3} parent=19 // pred_check_branch
        %105 = sbr.rel (%p103) target = $region24
      $region23: #{downsample_forward.3} parent=19 // pred_region
        %s106 = smul.u32 16, %s8
        %p107 = scmp.lt.s32.totalorder %s106, 31
        %s108 = scalar_select %p107, %s106, 31
        %s109 = smul.addr %s108, 4
        %s110 = scalar_lea.vmem %s0, %s109
        %s111 = smul.u32 16, %s8
      $region24: #{downsample_forward.3} parent=19 // pred_fallthru
        _
    $region20: #{downsample_forward.3} parent=5 // pred_fallthru
      _
    %p112 = scmp.le.s32.totalorder 1, %s8
    %p113 = scmp.lt.s32.totalorder %s8, 3
    %p114 = pnand %p112, %p113
    %p115 = pneg %p114
    // Predicated region
    $region25: #{downsample_forward.3} parent=5 // pred_check
      _
    $region26: #{downsample_forward.3} parent=5 // pred_check_branch
      %117 = sbr.rel (%p114) target = $region28
    $region27: #{downsample_forward.3} parent=5 // pred_region
      %s118 = ssub.s32 %s8, 1
      %s119 = smul.u32 16, %s13
      %p120 = scmp.lt.s32.totalorder %s119, 31
      %s121 = scalar_select %p120, %s119, 31
      %s122 = smul.addr %s121, 4
      %s123 = scalar_lea.vmem %s0, %s122
      %p124 = pneg %p34
      %p125 = pneg %p31
      %p126 = pneg %p55
      %p127 = pneg %p52
      %p128 = pneg %p81
      %p129 = pneg %p78
      %s130 = smul.u32 16, %s13
      %p131 = scmp.lt.s32.totalorder %s130, 31
      %s132 = scalar_select %p131, %s130, 31
      %s133 = smul.addr %s132, 8
      %s134 = scalar_lea.vmem %s2, %s133
      %s135 = smul.u32 16, %s13
      %p136 = scmp.lt.s32.totalorder %s135, 31
      %s137 = scalar_select %p136, %s135, 31
      %s138 = smul.addr %s137, 4
      %s139 = scalar_lea.vmem %s0, %s138
      %s140 = smul.u32 16, %s13
      %s141 = smul.u32 16, %s13
      %p142 = scmp.lt.s32.totalorder %s141, 31
      %s143 = scalar_select %p142, %s141, 31
      %s144 = smul.addr %s143, 8
      %s145 = scalar_lea.vmem %s2, %s144
      %s146 = smul.u32 16, %s13
      %v147 = vld [vmem:[%s139] sm:$0xf]
      %v148 = vld [vmem:[%s139 + $0x4] sm:$0xf]
      %v149 = vld [vmem:[%s139 + $0x8] sm:$0xf]
      %v150 = vld [vmem:[%s139 + $0xc] sm:$0xf]
      %v151 = vld [vmem:[%s139 + $0x10] sm:$0xf]
      %v152 = vld [vmem:[%s139 + $0x14] sm:$0xf]
      %v153 = vld [vmem:[%s139 + $0x18] sm:$0xf]
      %v154 = vld [vmem:[%s139 + $0x1c] sm:$0xf]
      %v155 = vld [vmem:[%s139 + $0x20] sm:$0xf]
      %v156 = vld [vmem:[%s139 + $0x24] sm:$0xf]
      %v157 = vld [vmem:[%s139 + $0x28] sm:$0xf]
      %v158 = vld [vmem:[%s139 + $0x2c] sm:$0xf]
      %v159 = vld [vmem:[%s139 + $0x30] sm:$0xf]
      %v160 = vld [vmem:[%s139 + $0x34] sm:$0xf]
      %v161 = vld [vmem:[%s139 + $0x38] sm:$0xf]
      %v162 = vld [vmem:[%s139 + $0x3c] sm:$0xf]
      %v163 = vunpack.c.l.bf16 %v147
      %v164 = vunpack.c.l.bf16 %v148
      %v165 = vunpack.c.l.bf16 %v149
      %v166 = vunpack.c.l.bf16 %v150
      %v167 = vunpack.c.l.bf16 %v151
      %v168 = vunpack.c.l.bf16 %v152
      %v169 = vunpack.c.l.bf16 %v153
      %v170 = vunpack.c.l.bf16 %v154
      %v171 = vunpack.c.l.bf16 %v155
      %v172 = vunpack.c.l.bf16 %v156
      %v173 = vunpack.c.l.bf16 %v157
      %v174 = vunpack.c.l.bf16 %v158
      %v175 = vunpack.c.l.bf16 %v159
      %v176 = vunpack.c.l.bf16 %v160
      %v177 = vunpack.c.l.bf16 %v161
      %v178 = vunpack.c.l.bf16 %v162
      %v179 = vld [vmem:[%s1] sm:$0x1]
      %v180 = vperm.slane %v179, 0
      %v181 = vmul.f32 %v163, %v180
      %v182 = vmul.f32 %v164, %v180
      %v183 = vmul.f32 %v165, %v180
      %v184 = vmul.f32 %v166, %v180
      %v185 = vmul.f32 %v167, %v180
      %v186 = vmul.f32 %v168, %v180
      %v187 = vmul.f32 %v169, %v180
      %v188 = vmul.f32 %v170, %v180
      %v189 = vmul.f32 %v171, %v180
      %v190 = vmul.f32 %v172, %v180
      %v191 = vmul.f32 %v173, %v180
      %v192 = vmul.f32 %v174, %v180
      %v193 = vmul.f32 %v175, %v180
      %v194 = vmul.f32 %v176, %v180
      %v195 = vmul.f32 %v177, %v180
      %v196 = vmul.f32 %v178, %v180
      %v197 = vld [vmem:[%s1 + $0x1] sm:$0x1]
      %v198 = vperm.slane %v197, 0
      %v199 = vadd.f32 %v181, %v198
      %v200 = vadd.f32 %v182, %v198
      %v201 = vadd.f32 %v183, %v198
      %v202 = vadd.f32 %v184, %v198
      %v203 = vadd.f32 %v185, %v198
      %v204 = vadd.f32 %v186, %v198
      %v205 = vadd.f32 %v187, %v198
      %v206 = vadd.f32 %v188, %v198
      %v207 = vadd.f32 %v189, %v198
      %v208 = vadd.f32 %v190, %v198
      %v209 = vadd.f32 %v191, %v198
      %v210 = vadd.f32 %v192, %v198
      %v211 = vadd.f32 %v193, %v198
      %v212 = vadd.f32 %v194, %v198
      %v213 = vadd.f32 %v195, %v198
      %v214 = vadd.f32 %v196, %v198
      %vm215 = vcmp.ge.f32.partialorder %v199, 0.0
      %vm216 = vcmp.ge.f32.partialorder %v200, 0.0
      %vm217 = vcmp.ge.f32.partialorder %v201, 0.0
      %vm218 = vcmp.ge.f32.partialorder %v202, 0.0
      %vm219 = vcmp.ge.f32.partialorder %v203, 0.0
      %vm220 = vcmp.ge.f32.partialorder %v204, 0.0
      %vm221 = vcmp.ge.f32.partialorder %v205, 0.0
      %vm222 = vcmp.ge.f32.partialorder %v206, 0.0
      %vm223 = vcmp.ge.f32.partialorder %v207, 0.0
      %vm224 = vcmp.ge.f32.partialorder %v208, 0.0
      %vm225 = vcmp.ge.f32.partialorder %v209, 0.0
      %vm226 = vcmp.ge.f32.partialorder %v210, 0.0
      %vm227 = vcmp.ge.f32.partialorder %v211, 0.0
      %vm228 = vcmp.ge.f32.partialorder %v212, 0.0
      %vm229 = vcmp.ge.f32.partialorder %v213, 0.0
      %vm230 = vcmp.ge.f32.partialorder %v214, 0.0
      %v231 = vmul.f32 %v199, 0.01
      %v232 = vmul.f32 %v200, 0.01
      %v233 = vmul.f32 %v201, 0.01
      %v234 = vmul.f32 %v202, 0.01
      %v235 = vmul.f32 %v203, 0.01
      %v236 = vmul.f32 %v204, 0.01
      %v237 = vmul.f32 %v205, 0.01
      %v238 = vmul.f32 %v206, 0.01
      %v239 = vmul.f32 %v207, 0.01
      %v240 = vmul.f32 %v208, 0.01
      %v241 = vmul.f32 %v209, 0.01
      %v242 = vmul.f32 %v210, 0.01
      %v243 = vmul.f32 %v211, 0.01
      %v244 = vmul.f32 %v212, 0.01
      %v245 = vmul.f32 %v213, 0.01
      %v246 = vmul.f32 %v214, 0.01
      %v247 = vsel %vm215, %v199, %v231
      %v248 = vsel %vm216, %v200, %v232
      %v249 = vsel %vm217, %v201, %v233
      %v250 = vsel %vm218, %v202, %v234
      %v251 = vsel %vm219, %v203, %v235
      %v252 = vsel %vm220, %v204, %v236
      %v253 = vsel %vm221, %v205, %v237
      %v254 = vsel %vm222, %v206, %v238
      %v255 = vsel %vm223, %v207, %v239
      %v256 = vsel %vm224, %v208, %v240
      %v257 = vsel %vm225, %v209, %v241
      %v258 = vsel %vm226, %v210, %v242
      %v259 = vsel %vm227, %v211, %v243
      %v260 = vsel %vm228, %v212, %v244
      %v261 = vsel %vm229, %v213, %v245
      %v262 = vsel %vm230, %v214, %v246
      %263 = vst [vmem:[%s145] sm:$0xff] %v247
      %264 = vst [vmem:[%s145 + $0x8] sm:$0xff] %v248
      %265 = vst [vmem:[%s145 + $0x10] sm:$0xff] %v249
      %266 = vst [vmem:[%s145 + $0x18] sm:$0xff] %v250
      %267 = vst [vmem:[%s145 + $0x20] sm:$0xff] %v251
      %268 = vst [vmem:[%s145 + $0x28] sm:$0xff] %v252
      %269 = vst [vmem:[%s145 + $0x30] sm:$0xff] %v253
      %270 = vst [vmem:[%s145 + $0x38] sm:$0xff] %v254
      %271 = vst [vmem:[%s145 + $0x40] sm:$0xff] %v255
      %272 = vst [vmem:[%s145 + $0x48] sm:$0xff] %v256
      %273 = vst [vmem:[%s145 + $0x50] sm:$0xff] %v257
      %274 = vst [vmem:[%s145 + $0x58] sm:$0xff] %v258
      %275 = vst [vmem:[%s145 + $0x60] sm:$0xff] %v259
      %276 = vst [vmem:[%s145 + $0x68] sm:$0xff] %v260
      %277 = vst [vmem:[%s145 + $0x70] sm:$0xff] %v261
      %278 = vst [vmem:[%s145 + $0x78] sm:$0xff] %v262
      %s279 = smul.u32 16, %s13
      %p280 = scmp.lt.s32.totalorder %s279, 31
      %s281 = scalar_select %p280, %s279, 31
      %s282 = smul.addr %s281, 8
      %s283 = scalar_lea.vmem %s2, %s282
      // Predicated region
      $region29: #{downsample_forward.3} parent=27 // pred_check
        %p284 = pneg %p78
      $region30: #{downsample_forward.3} parent=27 // pred_check_branch
        %286 = sbr.rel (%p284) target = $region32
      $region31: #{downsample_forward.3} parent=27 // pred_region
        %s287 = smul.u32 16, %s13
      $region32: #{downsample_forward.3} parent=27 // pred_fallthru
        _
    $region28: #{downsample_forward.3} parent=5 // pred_fallthru
      _
    %p288 = scmp.le.s32.totalorder 2, %s8
    // Predicated region
    $region33: #{downsample_forward.3} parent=5 // pred_check
      %p289 = pneg %p288
    $region34: #{downsample_forward.3} parent=5 // pred_check_branch
      %291 = sbr.rel (%p289) target = $region36
    $region35: #{downsample_forward.3} parent=5 // pred_region
      %s292 = ssub.s32 %s8, 2
      // Predicated region
      $region37: #{downsample_forward.3} parent=35 // pred_check
        %p293 = pneg %p84
      $region38: #{downsample_forward.3} parent=35 // pred_check_branch
        %295 = sbr.rel (%p293) target = $region40
      $region39: #{downsample_forward.3} parent=35 // pred_region
        %s296 = smul.u32 16, %s14
        %p297 = scmp.lt.s32.totalorder %s296, 31
        %s298 = scalar_select %p297, %s296, 31
        %s299 = smul.addr %s298, 8
        %s300 = scalar_lea.vmem %s2, %s299
      $region40: #{downsample_forward.3} parent=35 // pred_fallthru
        _
    $region36: #{downsample_forward.3} parent=5 // pred_fallthru
      _
  $region6: #{downsample_forward.3} parent=0 // loop_footer
    %s12 = sadd.s32 1, %s8
  $region7: #{downsample_forward.3} parent=0 // loop_footer_branch
    %7 = sbr.rel target = $region3
  $region8: #{downsample_forward.3} parent=0 // loop_exit
    _

// kernel: downsample_forward.2
$region0: #{downsample_forward.2}
  #allocation0 [shape = 'u32[]', space=smem, size = 0x4, offset = 0x4, fixed_abs, tag = 'smem constant byte address 0x4 - core index']
  #allocation1 [shape = 'u32[72,128]{1,0:T(1,128)}', space=vmem, size = 0x9000, scoped, tag = 'internal scratch']
  %s0 = inlined_call_operand.vmem [shape: bf16[2,9,17,4], index: 0, kind: input, shape index: {}, may-alias: {0,1}]
  %s1 = inlined_call_operand.vmem [shape: bf16[2,9,17,4], index: 1, kind: input, shape index: {}, may-alias: {0,1}]
  %s2 = inlined_call_operand.vmem [shape: bf16[2,9,17,4], index: 2, kind: input, shape index: {}, may-alias: {2,3}]
  %s3 = inlined_call_operand.vmem [shape: bf16[2,9,17,4], index: 3, kind: input, shape index: {}, may-alias: {2,3}]
  %s4 = inlined_call_operand.vmem [shape: bf16[2,9,17,4], index: 4, kind: input, shape index: {}]
  %s5 = inlined_call_operand.vmem [shape: bf16[2,9,17,4], index: 5, kind: input, shape index: {}]
  %s6 = inlined_call_operand.vmem [shape: bf16[9,4,128], index: 6, kind: input, shape index: {}]
  %s7 = inlined_call_operand.vmem [shape: bf16[256,128], index: 7, kind: output, shape index: {0}]
  %s8 = inlined_call_operand.vmem [shape: f32[2,1,2,128], index: 8, kind: output, shape index: {1}]
  %9 = xla_tuple %s7, %s8
  %s10 = sld [smem:[#allocation0]]
  $region69: #{downsample_forward.2} parent=0
    _
  %s12 = ssub.s32 1, %s10
  %s13 = scalar_select 0, %s12, %s10
  loop: start=0, step=1, limit=4
  $region2: #{downsample_forward.2} parent=0 // loop_pre_header
    _
  $region3: #{downsample_forward.2} parent=0 // loop_header
    %s15 = sphi 0, %s19
    %p16 = scmp.ge.s32.totalorder %s15, 4
    %s22 = sphi 0, %s34
    %s23 = sphi 0, %s30
    %s24 = sphi 0, %s22
    %s25 = sphi 0, %s23
    %s26 = sphi 0, %s24
    %s27 = sphi 0, %s25
    %s39 = sphi 0, %s41
    %s42 = sphi 0, %s39
    %s43 = sphi 0, %s42
    %s59 = sphi 0, %s43
    %s71 = sphi 0, %s73
    %s74 = sphi 0, %s71
    %s75 = sphi 0, %s74
    %s91 = sphi 0, %s75
    %s99 = sphi 0, %s101
    %s102 = sphi 0, %s99
    %s103 = sphi 0, %s102
    %s119 = sphi 0, %s103
    %s131 = sphi 0, %s133
    %s134 = sphi 0, %s131
    %s135 = sphi 0, %s134
    %s151 = sphi 0, %s135
    %s159 = sphi 0, %s161
    %s162 = sphi 0, %s159
    %s163 = sphi 0, %s162
    %s179 = sphi 0, %s163
    %s187 = sphi 0, %s189
    %s190 = sphi 0, %s187
    %s191 = sphi 0, %s190
    %s207 = sphi 0, %s191
    %s211 = sphi 0, %s211
    %s213 = sphi 0, %s211
    %s214 = sphi 0, %s213
    %s228 = sphi 0, %s214
    %s236 = sphi 0, %s238
    %s239 = sphi 0, %s236
    %s240 = sphi 0, %s239
    %s256 = sphi 0, %s240
    %s264 = sphi 0, %s266
    %s267 = sphi 0, %s264
    %s268 = sphi 0, %s267
    %s284 = sphi 0, %s268
  $region4: #{downsample_forward.2} parent=0 // loop_header_branch
    %18 = sbr.rel (%p16) target = $region8
  $region5: #{downsample_forward.2} parent=0 // loop_body
    %s20 = ssub.s32 %s15, 1
    %s21 = ssub.s32 %s15, 2
    %s28 = sadd.s32 1, %s23
    %p29 = scmp.ge.s32.totalorder %s28, 1
    %s30 = scalar_select %p29, 0, %s28
    %s31 = sadd.s32 1, %s22
    %s32 = scalar_select %p29, %s31, %s22
    %p33 = scmp.ge.s32.totalorder %s32, 2
    %s34 = scalar_select %p33, 0, %s32
    %s35 = ssub.s32 %s22, %s34
    %s36 = ssub.s32 %s23, %s30
    %s37 = sor.u32 %s35, %s36
    %p38 = scmp.eq.s32.totalorder %s37, 0
    %s40 = sadd.s32 %s39, 1
    %s41 = scalar_select %p38, %s39, %s40
    %p44 = pneg %p38
    %p45 = scmp.eq.s32.totalorder %s15, 1
    %p46 = por %p44, %p45
    %p47 = scmp.ne.s32.totalorder %s39, %s42
    %p48 = scmp.eq.s32.totalorder %s15, 0
    %p49 = por %p47, %p48
    %p50 = scmp.ne.s32.totalorder %s39, %s42
    %p51 = scmp.eq.s32.totalorder %s20, 1
    %p52 = por %p50, %p51
    %p53 = scmp.ne.s32.totalorder %s42, %s43
    %p54 = scmp.eq.s32.totalorder %s20, 0
    %p55 = por %p53, %p54
    %p56 = scmp.ne.s32.totalorder %s42, %s43
    %p57 = scmp.eq.s32.totalorder %s21, 1
    %p58 = por %p56, %p57
    %p60 = scmp.ne.s32.totalorder %s43, %s59
    %p61 = scmp.eq.s32.totalorder %s21, 0
    %p62 = por %p60, %p61
    %s63 = sadd.s32 %s23, 1
    %s64 = smul.u32 %s63, 8
    %s65 = sadd.s32 %s30, 1
    %s66 = smul.u32 %s65, 8
    %s67 = ssub.s32 %s22, %s34
    %s68 = ssub.s32 %s64, %s66
    %s69 = sor.u32 %s67, %s68
    %p70 = scmp.eq.s32.totalorder %s69, 0
    %s72 = sadd.s32 %s71, 1
    %s73 = scalar_select %p70, %s71, %s72
    %p76 = pneg %p70
    %p77 = scmp.eq.s32.totalorder %s15, 1
    %p78 = por %p76, %p77
    %p79 = scmp.ne.s32.totalorder %s71, %s74
    %p80 = scmp.eq.s32.totalorder %s15, 0
    %p81 = por %p79, %p80
    %p82 = scmp.ne.s32.totalorder %s71, %s74
    %p83 = scmp.eq.s32.totalorder %s20, 1
    %p84 = por %p82, %p83
    %p85 = scmp.ne.s32.totalorder %s74, %s75
    %p86 = scmp.eq.s32.totalorder %s20, 0
    %p87 = por %p85, %p86
    %p88 = scmp.ne.s32.totalorder %s74, %s75
    %p89 = scmp.eq.s32.totalorder %s21, 1
    %p90 = por %p88, %p89
    %p92 = scmp.ne.s32.totalorder %s75, %s91
    %p93 = scmp.eq.s32.totalorder %s21, 0
    %p94 = por %p92, %p93
    %s95 = ssub.s32 %s22, %s34
    %s96 = ssub.s32 %s23, %s30
    %s97 = sor.u32 %s95, %s96
    %p98 = scmp.eq.s32.totalorder %s97, 0
    %s100 = sadd.s32 %s99, 1
    %s101 = scalar_select %p98, %s99, %s100
    %p104 = pneg %p98
    %p105 = scmp.eq.s32.totalorder %s15, 1
    %p106 = por %p104, %p105
    %p107 = scmp.ne.s32.totalorder %s99, %s102
    %p108 = scmp.eq.s32.totalorder %s15, 0
    %p109 = por %p107, %p108
    %p110 = scmp.ne.s32.totalorder %s99, %s102
    %p111 = scmp.eq.s32.totalorder %s20, 1
    %p112 = por %p110, %p111
    %p113 = scmp.ne.s32.totalorder %s102, %s103
    %p114 = scmp.eq.s32.totalorder %s20, 0
    %p115 = por %p113, %p114
    %p116 = scmp.ne.s32.totalorder %s102, %s103
    %p117 = scmp.eq.s32.totalorder %s21, 1
    %p118 = por %p116, %p117
    %p120 = scmp.ne.s32.totalorder %s103, %s119
    %p121 = scmp.eq.s32.totalorder %s21, 0
    %p122 = por %p120, %p121
    %s123 = sadd.s32 %s23, 1
    %s124 = smul.u32 %s123, 8
    %s125 = sadd.s32 %s30, 1
    %s126 = smul.u32 %s125, 8
    %s127 = ssub.s32 %s22, %s34
    %s128 = ssub.s32 %s124, %s126
    %s129 = sor.u32 %s127, %s128
    %p130 = scmp.eq.s32.totalorder %s129, 0
    %s132 = sadd.s32 %s131, 1
    %s133 = scalar_select %p130, %s131, %s132
    %p136 = pneg %p130
    %p137 = scmp.eq.s32.totalorder %s15, 1
    %p138 = por %p136, %p137
    %p139 = scmp.ne.s32.totalorder %s131, %s134
    %p140 = scmp.eq.s32.totalorder %s15, 0
    %p141 = por %p139, %p140
    %p142 = scmp.ne.s32.totalorder %s131, %s134
    %p143 = scmp.eq.s32.totalorder %s20, 1
    %p144 = por %p142, %p143
    %p145 = scmp.ne.s32.totalorder %s134, %s135
    %p146 = scmp.eq.s32.totalorder %s20, 0
    %p147 = por %p145, %p146
    %p148 = scmp.ne.s32.totalorder %s134, %s135
    %p149 = scmp.eq.s32.totalorder %s21, 1
    %p150 = por %p148, %p149
    %p152 = scmp.ne.s32.totalorder %s135, %s151
    %p153 = scmp.eq.s32.totalorder %s21, 0
    %p154 = por %p152, %p153
    %s155 = ssub.s32 %s22, %s34
    %s156 = ssub.s32 %s23, %s30
    %s157 = sor.u32 %s155, %s156
    %p158 = scmp.eq.s32.totalorder %s157, 0
    %s160 = sadd.s32 %s159, 1
    %s161 = scalar_select %p158, %s159, %s160
    %p164 = pneg %p158
    %p165 = scmp.eq.s32.totalorder %s15, 1
    %p166 = por %p164, %p165
    %p167 = scmp.ne.s32.totalorder %s159, %s162
    %p168 = scmp.eq.s32.totalorder %s15, 0
    %p169 = por %p167, %p168
    %p170 = scmp.ne.s32.totalorder %s159, %s162
    %p171 = scmp.eq.s32.totalorder %s20, 1
    %p172 = por %p170, %p171
    %p173 = scmp.ne.s32.totalorder %s162, %s163
    %p174 = scmp.eq.s32.totalorder %s20, 0
    %p175 = por %p173, %p174
    %p176 = scmp.ne.s32.totalorder %s162, %s163
    %p177 = scmp.eq.s32.totalorder %s21, 1
    %p178 = por %p176, %p177
    %p180 = scmp.ne.s32.totalorder %s163, %s179
    %p181 = scmp.eq.s32.totalorder %s21, 0
    %p182 = por %p180, %p181
    %s183 = ssub.s32 %s22, %s34
    %s184 = ssub.s32 %s23, %s30
    %s185 = sor.u32 %s183, %s184
    %p186 = scmp.eq.s32.totalorder %s185, 0
    %s188 = sadd.s32 %s187, 1
    %s189 = scalar_select %p186, %s187, %s188
    %p192 = pneg %p186
    %p193 = scmp.eq.s32.totalorder %s15, 1
    %p194 = por %p192, %p193
    %p195 = scmp.ne.s32.totalorder %s187, %s190
    %p196 = scmp.eq.s32.totalorder %s15, 0
    %p197 = por %p195, %p196
    %p198 = scmp.ne.s32.totalorder %s187, %s190
    %p199 = scmp.eq.s32.totalorder %s20, 1
    %p200 = por %p198, %p199
    %p201 = scmp.ne.s32.totalorder %s190, %s191
    %p202 = scmp.eq.s32.totalorder %s20, 0
    %p203 = por %p201, %p202
    %p204 = scmp.ne.s32.totalorder %s190, %s191
    %p205 = scmp.eq.s32.totalorder %s21, 1
    %p206 = por %p204, %p205
    %p208 = scmp.ne.s32.totalorder %s191, %s207
    %p209 = scmp.eq.s32.totalorder %s21, 0
    %p210 = por %p208, %p209
    %s212 = sadd.s32 %s211, 1
    %p215 = scmp.eq.s32.totalorder %s15, 1
    %p216 = scmp.ne.s32.totalorder %s211, %s213
    %p217 = scmp.eq.s32.totalorder %s15, 0
    %p218 = por %p216, %p217
    %p219 = scmp.ne.s32.totalorder %s211, %s213
    %p220 = scmp.eq.s32.totalorder %s20, 1
    %p221 = por %p219, %p220
    %p222 = scmp.ne.s32.totalorder %s213, %s214
    %p223 = scmp.eq.s32.totalorder %s20, 0
    %p224 = por %p222, %p223
    %p225 = scmp.ne.s32.totalorder %s213, %s214
    %p226 = scmp.eq.s32.totalorder %s21, 1
    %p227 = por %p225, %p226
    %p229 = scmp.ne.s32.totalorder %s214, %s228
    %p230 = scmp.eq.s32.totalorder %s21, 0
    %p231 = por %p229, %p230
    %s232 = sadd.s32 %s22, %s23
    %s233 = sadd.s32 %s34, %s30
    %s234 = ssub.s32 %s232, %s233
    %p235 = scmp.eq.s32.totalorder %s234, 0
    %s237 = sadd.s32 %s236, 1
    %s238 = scalar_select %p235, %s236, %s237
    %p241 = pneg %p235
    %p242 = scmp.eq.s32.totalorder %s15, 1
    %p243 = por %p241, %p242
    %p244 = scmp.ne.s32.totalorder %s236, %s239
    %p245 = scmp.eq.s32.totalorder %s15, 0
    %p246 = por %p244, %p245
    %p247 = scmp.ne.s32.totalorder %s236, %s239
    %p248 = scmp.eq.s32.totalorder %s20, 1
    %p249 = por %p247, %p248
    %p250 = scmp.ne.s32.totalorder %s239, %s240
    %p251 = scmp.eq.s32.totalorder %s20, 0
    %p252 = por %p250, %p251
    %p253 = scmp.ne.s32.totalorder %s239, %s240
    %p254 = scmp.eq.s32.totalorder %s21, 1
    %p255 = por %p253, %p254
    %p257 = scmp.ne.s32.totalorder %s240, %s256
    %p258 = scmp.eq.s32.totalorder %s21, 0
    %p259 = por %p257, %p258
    %s260 = ssub.s32 %s22, %s34
    %s261 = ssub.s32 %s23, %s30
    %s262 = sor.u32 %s260, %s261
    %p263 = scmp.eq.s32.totalorder %s262, 0
    %s265 = sadd.s32 %s264, 1
    %s266 = scalar_select %p263, %s264, %s265
    %p269 = pneg %p263
    %p270 = scmp.eq.s32.totalorder %s15, 1
    %p271 = por %p269, %p270
    %p272 = scmp.ne.s32.totalorder %s264, %s267
    %p273 = scmp.eq.s32.totalorder %s15, 0
    %p274 = por %p272, %p273
    %p275 = scmp.ne.s32.totalorder %s264, %s267
    %p276 = scmp.eq.s32.totalorder %s20, 1
    %p277 = por %p275, %p276
    %p278 = scmp.ne.s32.totalorder %s267, %s268
    %p279 = scmp.eq.s32.totalorder %s20, 0
    %p280 = por %p278, %p279
    %p281 = scmp.ne.s32.totalorder %s267, %s268
    %p282 = scmp.eq.s32.totalorder %s21, 1
    %p283 = por %p281, %p282
    %p285 = scmp.ne.s32.totalorder %s268, %s284
    %p286 = scmp.eq.s32.totalorder %s21, 0
    %p287 = por %p285, %p286
    %p288 = scmp.le.s32.totalorder 1, %s15
    %p289 = scmp.lt.s32.totalorder %s15, 3
    %p290 = pnand %p288, %p289
    %p291 = pneg %p290
    // Predicated region
    $region9: #{downsample_forward.2} parent=5 // pred_check
      _
    $region10: #{downsample_forward.2} parent=5 // pred_check_branch
      %293 = sbr.rel (%p290) target = $region12
    $region11: #{downsample_forward.2} parent=5 // pred_region
      %s294 = ssub.s32 %s15, 1
      // Predicated region
      $region13: #{downsample_forward.2} parent=11 // pred_check
        %p295 = pneg %p224
      $region14: #{downsample_forward.2} parent=11 // pred_check_branch
        %297 = sbr.rel (%p295) target = $region16
      $region15: #{downsample_forward.2} parent=11 // pred_region
        _
      $region16: #{downsample_forward.2} parent=11 // pred_fallthru
        _
    $region12: #{downsample_forward.2} parent=5 // pred_fallthru
      _
    %p298 = scmp.lt.s32.totalorder %s15, 2
    // Predicated region
    $region17: #{downsample_forward.2} parent=5 // pred_check
      %p299 = pneg %p298
    $region18: #{downsample_forward.2} parent=5 // pred_check_branch
      %301 = sbr.rel (%p299) target = $region20
    $region19: #{downsample_forward.2} parent=5 // pred_region
      // Predicated region
      $region21: #{downsample_forward.2} parent=19 // pred_check
        %p302 = pneg %p49
      $region22: #{downsample_forward.2} parent=19 // pred_check_branch
        %304 = sbr.rel (%p302) target = $region24
      $region23: #{downsample_forward.2} parent=19 // pred_region
        %s305 = smul.u32 8, %s23
        %s306 = ssub.s32 9, %s305
        %p307 = scmp.lt.s32.totalorder %s306, 8
        %s308 = scalar_select %p307, %s306, 8
        %s309 = smul.u32 4, %s308
        %s310 = smul.u32 %s309, 3
        %p311 = scmp.lt.s32.totalorder %s22, 1
        %s312 = scalar_select %p311, %s22, 1
        %p313 = scmp.lt.s32.totalorder %s305, 8
        %s314 = scalar_select %p313, %s305, 8
        %s315 = smul.addr %s314, 3
        %s316 = smul.addr %s312, 27
        %s317 = sadd.s32 %s315, %s316
        %s318 = smul.addr %s317, 4
        %s319 = scalar_lea.vmem %s0, %s318
        %s320 = smul.u32 8, %s23
        %s321 = ssub.s32 9, %s320
        %p322 = scmp.lt.s32.totalorder %s321, 8
        %s323 = scalar_select %p322, %s321, 8
        %s324 = smul.u32 4, %s323
        %s325 = smul.u32 %s324, 3
      $region24: #{downsample_forward.2} parent=19 // pred_fallthru
        _
      // Predicated region
      $region25: #{downsample_forward.2} parent=19 // pred_check
        %p326 = pneg %p81
      $region26: #{downsample_forward.2} parent=19 // pred_check_branch
        %328 = sbr.rel (%p326) target = $region28
      $region27: #{downsample_forward.2} parent=19 // pred_region
        %s329 = sadd.s32 %s23, 1
        %s330 = smul.u32 %s329, 8
        %p331 = scmp.lt.s32.totalorder %s22, 1
        %s332 = scalar_select %p331, %s22, 1
        %p333 = scmp.lt.s32.totalorder %s330, 8
        %s334 = scalar_select %p333, %s330, 8
        %s335 = smul.addr %s334, 3
        %s336 = smul.addr %s332, 27
        %s337 = sadd.s32 %s335, %s336
        %s338 = smul.addr %s337, 4
        %s339 = scalar_lea.vmem %s1, %s338
        %s340 = sadd.s32 %s23, 1
        %s341 = smul.u32 %s340, 8
      $region28: #{downsample_forward.2} parent=19 // pred_fallthru
        _
      // Predicated region
      $region29: #{downsample_forward.2} parent=19 // pred_check
        %p342 = pneg %p109
      $region30: #{downsample_forward.2} parent=19 // pred_check_branch
        %344 = sbr.rel (%p342) target = $region32
      $region31: #{downsample_forward.2} parent=19 // pred_region
        %s345 = smul.u32 8, %s23
        %s346 = ssub.s32 9, %s345
        %p347 = scmp.lt.s32.totalorder %s346, 8
        %s348 = scalar_select %p347, %s346, 8
        %s349 = smul.u32 4, %s348
        %s350 = smul.u32 %s349, 3
        %p351 = scmp.lt.s32.totalorder %s22, 1
        %s352 = scalar_select %p351, %s22, 1
        %p353 = scmp.lt.s32.totalorder %s345, 8
        %s354 = scalar_select %p353, %s345, 8
        %s355 = smul.addr %s354, 3
        %s356 = smul.addr %s352, 27
        %s357 = sadd.s32 %s355, %s356
        %s358 = smul.addr %s357, 4
        %s359 = scalar_lea.vmem %s2, %s358
        %s360 = smul.u32 8, %s23
        %s361 = ssub.s32 9, %s360
        %p362 = scmp.lt.s32.totalorder %s361, 8
        %s363 = scalar_select %p362, %s361, 8
        %s364 = smul.u32 4, %s363
        %s365 = smul.u32 %s364, 3
      $region32: #{downsample_forward.2} parent=19 // pred_fallthru
        _
      // Predicated region
      $region33: #{downsample_forward.2} parent=19 // pred_check
        %p366 = pneg %p141
      $region34: #{downsample_forward.2} parent=19 // pred_check_branch
        %368 = sbr.rel (%p366) target = $region36
      $region35: #{downsample_forward.2} parent=19 // pred_region
        %s369 = sadd.s32 %s23, 1
        %s370 = smul.u32 %s369, 8
        %p371 = scmp.lt.s32.totalorder %s22, 1
        %s372 = scalar_select %p371, %s22, 1
        %p373 = scmp.lt.s32.totalorder %s370, 8
        %s374 = scalar_select %p373, %s370, 8
        %s375 = smul.addr %s374, 3
        %s376 = smul.addr %s372, 27
        %s377 = sadd.s32 %s375, %s376
        %s378 = smul.addr %s377, 4
        %s379 = scalar_lea.vmem %s3, %s378
        %s380 = sadd.s32 %s23, 1
        %s381 = smul.u32 %s380, 8
      $region36: #{downsample_forward.2} parent=19 // pred_fallthru
        _
      // Predicated region
      $region37: #{downsample_forward.2} parent=19 // pred_check
        %p382 = pneg %p169
      $region38: #{downsample_forward.2} parent=19 // pred_check_branch
        %384 = sbr.rel (%p382) target = $region40
      $region39: #{downsample_forward.2} parent=19 // pred_region
        %s385 = smul.u32 8, %s23
        %s386 = ssub.s32 9, %s385
        %p387 = scmp.lt.s32.totalorder %s386, 8
        %s388 = scalar_select %p387, %s386, 8
        %s389 = smul.u32 4, %s388
        %s390 = smul.u32 %s389, 3
        %p391 = scmp.lt.s32.totalorder %s22, 1
        %s392 = scalar_select %p391, %s22, 1
        %p393 = scmp.lt.s32.totalorder %s385, 8
        %s394 = scalar_select %p393, %s385, 8
        %s395 = smul.addr %s394, 3
        %s396 = smul.addr %s392, 27
        %s397 = sadd.s32 %s395, %s396
        %s398 = smul.addr %s397, 4
        %s399 = scalar_lea.vmem %s4, %s398
        %s400 = smul.u32 8, %s23
        %s401 = ssub.s32 9, %s400
        %p402 = scmp.lt.s32.totalorder %s401, 8
        %s403 = scalar_select %p402, %s401, 8
        %s404 = smul.u32 4, %s403
        %s405 = smul.u32 %s404, 3
      $region40: #{downsample_forward.2} parent=19 // pred_fallthru
        _
      // Predicated region
      $region41: #{downsample_forward.2} parent=19 // pred_check
        %p406 = pneg %p197
      $region42: #{downsample_forward.2} parent=19 // pred_check_branch
        %408 = sbr.rel (%p406) target = $region44
      $region43: #{downsample_forward.2} parent=19 // pred_region
        %s409 = smul.u32 8, %s23
        %s410 = ssub.s32 9, %s409
        %p411 = scmp.lt.s32.totalorder %s410, 8
        %s412 = scalar_select %p411, %s410, 8
        %s413 = smul.u32 4, %s412
        %s414 = smul.u32 %s413, 3
        %p415 = scmp.lt.s32.totalorder %s22, 1
        %s416 = scalar_select %p415, %s22, 1
        %p417 = scmp.lt.s32.totalorder %s409, 8
        %s418 = scalar_select %p417, %s409, 8
        %s419 = smul.addr %s418, 3
        %s420 = smul.addr %s416, 27
        %s421 = sadd.s32 %s419, %s420
        %s422 = smul.addr %s421, 4
        %s423 = scalar_lea.vmem %s5, %s422
        %s424 = smul.u32 8, %s23
        %s425 = ssub.s32 9, %s424
        %p426 = scmp.lt.s32.totalorder %s425, 8
        %s427 = scalar_select %p426, %s425, 8
        %s428 = smul.u32 4, %s427
        %s429 = smul.u32 %s428, 3
      $region44: #{downsample_forward.2} parent=19 // pred_fallthru
        _
    $region20: #{downsample_forward.2} parent=5 // pred_fallthru
      _
    %p430 = scmp.le.s32.totalorder 1, %s15
    %p431 = scmp.lt.s32.totalorder %s15, 3
    %p432 = pnand %p430, %p431
    %p433 = pneg %p432
    // Predicated region
    $region45: #{downsample_forward.2} parent=5 // pred_check
      _
    $region46: #{downsample_forward.2} parent=5 // pred_check_branch
      %435 = sbr.rel (%p432) target = $region48
    $region47: #{downsample_forward.2} parent=5 // pred_region
      %s436 = ssub.s32 %s15, 1
      %s437 = smul.u32 8, %s25
      %s438 = ssub.s32 9, %s437
      %p439 = scmp.lt.s32.totalorder %s438, 8
      %s440 = scalar_select %p439, %s438, 8
      %s441 = smul.u32 4, %s440
      %s442 = smul.u32 %s441, 3
      %p443 = scmp.lt.s32.totalorder %s24, 1
      %s444 = scalar_select %p443, %s24, 1
      %p445 = scmp.lt.s32.totalorder %s437, 8
      %s446 = scalar_select %p445, %s437, 8
      %s447 = smul.addr %s446, 3
      %s448 = smul.addr %s444, 27
      %s449 = sadd.s32 %s447, %s448
      %s450 = smul.addr %s449, 4
      %s451 = scalar_lea.vmem %s0, %s450
      %p452 = pneg %p55
      %p453 = pneg %p52
      %s454 = sadd.s32 %s25, 1
      %s455 = smul.u32 %s454, 8
      %p456 = scmp.lt.s32.totalorder %s24, 1
      %s457 = scalar_select %p456, %s24, 1
      %p458 = scmp.lt.s32.totalorder %s455, 8
      %s459 = scalar_select %p458, %s455, 8
      %s460 = smul.addr %s459, 3
      %s461 = smul.addr %s457, 27
      %s462 = sadd.s32 %s460, %s461
      %s463 = smul.addr %s462, 4
      %s464 = scalar_lea.vmem %s1, %s463
      %p465 = pneg %p87
      %p466 = pneg %p84
      %s467 = smul.u32 8, %s25
      %s468 = ssub.s32 9, %s467
      %p469 = scmp.lt.s32.totalorder %s468, 8
      %s470 = scalar_select %p469, %s468, 8
      %s471 = smul.u32 4, %s470
      %s472 = smul.u32 %s471, 3
      %p473 = scmp.lt.s32.totalorder %s24, 1
      %s474 = scalar_select %p473, %s24, 1
      %p475 = scmp.lt.s32.totalorder %s467, 8
      %s476 = scalar_select %p475, %s467, 8
      %s477 = smul.addr %s476, 3
      %s478 = smul.addr %s474, 27
      %s479 = sadd.s32 %s477, %s478
      %s480 = smul.addr %s479, 4
      %s481 = scalar_lea.vmem %s2, %s480
      %p482 = pneg %p115
      %p483 = pneg %p112
      %s484 = sadd.s32 %s25, 1
      %s485 = smul.u32 %s484, 8
      %p486 = scmp.lt.s32.totalorder %s24, 1
      %s487 = scalar_select %p486, %s24, 1
      %p488 = scmp.lt.s32.totalorder %s485, 8
      %s489 = scalar_select %p488, %s485, 8
      %s490 = smul.addr %s489, 3
      %s491 = smul.addr %s487, 27
      %s492 = sadd.s32 %s490, %s491
      %s493 = smul.addr %s492, 4
      %s494 = scalar_lea.vmem %s3, %s493
      %p495 = pneg %p147
      %p496 = pneg %p144
      %s497 = smul.u32 8, %s25
      %s498 = ssub.s32 9, %s497
      %p499 = scmp.lt.s32.totalorder %s498, 8
      %s500 = scalar_select %p499, %s498, 8
      %s501 = smul.u32 4, %s500
      %s502 = smul.u32 %s501, 3
      %p503 = scmp.lt.s32.totalorder %s24, 1
      %s504 = scalar_select %p503, %s24, 1
      %p505 = scmp.lt.s32.totalorder %s497, 8
      %s506 = scalar_select %p505, %s497, 8
      %s507 = smul.addr %s506, 3
      %s508 = smul.addr %s504, 27
      %s509 = sadd.s32 %s507, %s508
      %s510 = smul.addr %s509, 4
      %s511 = scalar_lea.vmem %s4, %s510
      %p512 = pneg %p175
      %p513 = pneg %p172
      %s514 = smul.u32 8, %s25
      %s515 = ssub.s32 9, %s514
      %p516 = scmp.lt.s32.totalorder %s515, 8
      %s517 = scalar_select %p516, %s515, 8
      %s518 = smul.u32 4, %s517
      %s519 = smul.u32 %s518, 3
      %p520 = scmp.lt.s32.totalorder %s24, 1
      %s521 = scalar_select %p520, %s24, 1
      %p522 = scmp.lt.s32.totalorder %s514, 8
      %s523 = scalar_select %p522, %s514, 8
      %s524 = smul.addr %s523, 3
      %s525 = smul.addr %s521, 27
      %s526 = sadd.s32 %s524, %s525
      %s527 = smul.addr %s526, 4
      %s528 = scalar_lea.vmem %s5, %s527
      %p529 = pneg %p203
      %p530 = pneg %p200
      %p531 = pneg %p224
      %p532 = pneg %p221
      %p533 = pneg %p252
      %p534 = pneg %p249
      %s535 = sadd.s32 %s24, %s25
      %s536 = smul.u32 16, %s535
      %p537 = scmp.lt.s32.totalorder %s536, 31
      %s538 = scalar_select %p537, %s536, 31
      %s539 = smul.addr %s538, 4
      %s540 = scalar_lea.vmem %s7, %s539
      %p541 = pneg %p280
      %p542 = pneg %p277
      %p543 = scmp.lt.s32.totalorder %s24, 1
      %s544 = scalar_select %p543, %s24, 1
      %p545 = scmp.lt.s32.totalorder %s25, 0
      %s546 = scalar_select %p545, %s25, 0
      %s547 = sadd.s32 %s546, %s544
      %s548 = smul.addr %s547, 2
      %s549 = scalar_lea.vmem %s8, %s548
      %s550 = smul.u32 8, %s25
      %s551 = ssub.s32 9, %s550
      %p552 = scmp.lt.s32.totalorder %s551, 8
      %s553 = scalar_select %p552, %s551, 8
      %s554 = smul.u32 4, %s553
      %s555 = smul.u32 %s554, 3
      %p556 = scmp.lt.s32.totalorder %s24, 1
      %s557 = scalar_select %p556, %s24, 1
      %p558 = scmp.lt.s32.totalorder %s550, 8
      %s559 = scalar_select %p558, %s550, 8
      %s560 = smul.addr %s559, 3
      %s561 = smul.addr %s557, 27
      %s562 = sadd.s32 %s560, %s561
      %s563 = smul.addr %s562, 4
      %s564 = scalar_lea.vmem %s0, %s563
      %s565 = smul.u32 8, %s25
      %s566 = ssub.s32 9, %s565
      %p567 = scmp.lt.s32.totalorder %s566, 8
      %s568 = scalar_select %p567, %s566, 8
      %s569 = smul.u32 4, %s568
      %s570 = smul.u32 %s569, 3
      %s571 = sadd.s32 %s25, 1
      %s572 = smul.u32 %s571, 8
      %p573 = scmp.lt.s32.totalorder %s24, 1
      %s574 = scalar_select %p573, %s24, 1
      %p575 = scmp.lt.s32.totalorder %s572, 8
      %s576 = scalar_select %p575, %s572, 8
      %s577 = smul.addr %s576, 3
      %s578 = smul.addr %s574, 27
      %s579 = sadd.s32 %s577, %s578
      %s580 = smul.addr %s579, 4
      %s581 = scalar_lea.vmem %s1, %s580
      %s582 = sadd.s32 %s25, 1
      %s583 = smul.u32 %s582, 8
      %s584 = smul.u32 8, %s25
      %s585 = ssub.s32 9, %s584
      %p586 = scmp.lt.s32.totalorder %s585, 8
      %s587 = scalar_select %p586, %s585, 8
      %s588 = smul.u32 4, %s587
      %s589 = smul.u32 %s588, 3
      %p590 = scmp.lt.s32.totalorder %s24, 1
      %s591 = scalar_select %p590, %s24, 1
      %p592 = scmp.lt.s32.totalorder %s584, 8
      %s593 = scalar_select %p592, %s584, 8
      %s594 = smul.addr %s593, 3
      %s595 = smul.addr %s591, 27
      %s596 = sadd.s32 %s594, %s595
      %s597 = smul.addr %s596, 4
      %s598 = scalar_lea.vmem %s2, %s597
      %s599 = smul.u32 8, %s25
      %s600 = ssub.s32 9, %s599
      %p601 = scmp.lt.s32.totalorder %s600, 8
      %s602 = scalar_select %p601, %s600, 8
      %s603 = smul.u32 4, %s602
      %s604 = smul.u32 %s603, 3
      %s605 = sadd.s32 %s25, 1
      %s606 = smul.u32 %s605, 8
      %p607 = scmp.lt.s32.totalorder %s24, 1
      %s608 = scalar_select %p607, %s24, 1
      %p609 = scmp.lt.s32.totalorder %s606, 8
      %s610 = scalar_select %p609, %s606, 8
      %s611 = smul.addr %s610, 3
      %s612 = smul.addr %s608, 27
      %s613 = sadd.s32 %s611, %s612
      %s614 = smul.addr %s613, 4
      %s615 = scalar_lea.vmem %s3, %s614
      %s616 = sadd.s32 %s25, 1
      %s617 = smul.u32 %s616, 8
      %s618 = smul.u32 8, %s25
      %s619 = ssub.s32 9, %s618
      %p620 = scmp.lt.s32.totalorder %s619, 8
      %s621 = scalar_select %p620, %s619, 8
      %s622 = smul.u32 4, %s621
      %s623 = smul.u32 %s622, 3
      %p624 = scmp.lt.s32.totalorder %s24, 1
      %s625 = scalar_select %p624, %s24, 1
      %p626 = scmp.lt.s32.totalorder %s618, 8
      %s627 = scalar_select %p626, %s618, 8
      %s628 = smul.addr %s627, 3
      %s629 = smul.addr %s625, 27
      %s630 = sadd.s32 %s628, %s629
      %s631 = smul.addr %s630, 4
      %s632 = scalar_lea.vmem %s4, %s631
      %s633 = smul.u32 8, %s25
      %s634 = ssub.s32 9, %s633
      %p635 = scmp.lt.s32.totalorder %s634, 8
      %s636 = scalar_select %p635, %s634, 8
      %s637 = smul.u32 4, %s636
      %s638 = smul.u32 %s637, 3
      %s639 = smul.u32 8, %s25
      %s640 = ssub.s32 9, %s639
      %p641 = scmp.lt.s32.totalorder %s640, 8
      %s642 = scalar_select %p641, %s640, 8
      %s643 = smul.u32 4, %s642
      %s644 = smul.u32 %s643, 3
      %p645 = scmp.lt.s32.totalorder %s24, 1
      %s646 = scalar_select %p645, %s24, 1
      %p647 = scmp.lt.s32.totalorder %s639, 8
      %s648 = scalar_select %p647, %s639, 8
      %s649 = smul.addr %s648, 3
      %s650 = smul.addr %s646, 27
      %s651 = sadd.s32 %s649, %s650
      %s652 = smul.addr %s651, 4
      %s653 = scalar_lea.vmem %s5, %s652
      %s654 = smul.u32 8, %s25
      %s655 = ssub.s32 9, %s654
      %p656 = scmp.lt.s32.totalorder %s655, 8
      %s657 = scalar_select %p656, %s655, 8
      %s658 = smul.u32 4, %s657
      %s659 = smul.u32 %s658, 3
      %s660 = sadd.s32 %s24, %s25
      %s661 = smul.u32 16, %s660
      %p662 = scmp.lt.s32.totalorder %s661, 31
      %s663 = scalar_select %p662, %s661, 31
      %s664 = smul.addr %s663, 4
      %s665 = scalar_lea.vmem %s7, %s664
      %s666 = sadd.s32 %s24, %s25
      %s667 = smul.u32 16, %s666
      %p668 = scmp.lt.s32.totalorder %s24, 1
      %s669 = scalar_select %p668, %s24, 1
      %p670 = scmp.lt.s32.totalorder %s25, 0
      %s671 = scalar_select %p670, %s25, 0
      %s672 = sadd.s32 %s671, %s669
      %s673 = smul.addr %s672, 2
      %s674 = scalar_lea.vmem %s8, %s673
      %v676 = vld [vmem:[%s564] sm:$0xf]
      %v677 = vld [vmem:[%s564 + $0x4] sm:$0xf]
      %v678 = vld [vmem:[%s564 + $0x8] sm:$0x1]
      %v679 = vld [vmem:[%s564 + $0xc] sm:$0xf]
      %v680 = vld [vmem:[%s564 + $0x10] sm:$0xf]
      %v681 = vld [vmem:[%s564 + $0x14] sm:$0x1]
      %v682 = vld [vmem:[%s564 + $0x18] sm:$0xf]
      %v683 = vld [vmem:[%s564 + $0x1c] sm:$0xf]
      %v684 = vld [vmem:[%s564 + $0x20] sm:$0x1]
      %v685 = vld [vmem:[%s564 + $0x24] sm:$0xf]
      %v686 = vld [vmem:[%s564 + $0x28] sm:$0xf]
      %v687 = vld [vmem:[%s564 + $0x2c] sm:$0x1]
      %v688 = vld [vmem:[%s564 + $0x30] sm:$0xf]
      %v689 = vld [vmem:[%s564 + $0x34] sm:$0xf]
      %v690 = vld [vmem:[%s564 + $0x38] sm:$0x1]
      %v691 = vld [vmem:[%s564 + $0x3c] sm:$0xf]
      %v692 = vld [vmem:[%s564 + $0x40] sm:$0xf]
      %v693 = vld [vmem:[%s564 + $0x44] sm:$0x1]
      %v694 = vld [vmem:[%s564 + $0x48] sm:$0xf]
      %v695 = vld [vmem:[%s564 + $0x4c] sm:$0xf]
      %v696 = vld [vmem:[%s564 + $0x50] sm:$0x1]
      %v697 = vld [vmem:[%s564 + $0x54] sm:$0xf]
      %v698 = vld [vmem:[%s564 + $0x58] sm:$0xf]
      %v699 = vld [vmem:[%s564 + $0x5c] sm:$0x1]
      %v700 = vld [vmem:[%s598] sm:$0xf]
      %v701 = vld [vmem:[%s598 + $0x4] sm:$0xf]
      %v702 = vld [vmem:[%s598 + $0xc] sm:$0xf]
      %v703 = vld [vmem:[%s598 + $0x10] sm:$0xf]
      %v704 = vld [vmem:[%s598 + $0x18] sm:$0xf]
      %v705 = vld [vmem:[%s598 + $0x1c] sm:$0xf]
      %v706 = vld [vmem:[%s598 + $0x24] sm:$0xf]
      %v707 = vld [vmem:[%s598 + $0x28] sm:$0xf]
      %v708 = vld [vmem:[%s598 + $0x30] sm:$0xf]
      %v709 = vld [vmem:[%s598 + $0x34] sm:$0xf]
      %v710 = vld [vmem:[%s598 + $0x3c] sm:$0xf]
      %v711 = vld [vmem:[%s598 + $0x40] sm:$0xf]
      %v712 = vld [vmem:[%s598 + $0x48] sm:$0xf]
      %v713 = vld [vmem:[%s598 + $0x4c] sm:$0xf]
      %v714 = vld [vmem:[%s598 + $0x54] sm:$0xf]
      %v715 = vld [vmem:[%s598 + $0x58] sm:$0xf]
      %v716 = vld [vmem:[%s632] sm:$0xf]
      %v717 = vld [vmem:[%s632 + $0x4] sm:$0xf]
      %v718 = vld [vmem:[%s632 + $0x8] sm:$0x1]
      %v719 = vld [vmem:[%s632 + $0xc] sm:$0xf]
      %v720 = vld [vmem:[%s632 + $0x10] sm:$0xf]
      %v721 = vld [vmem:[%s632 + $0x14] sm:$0x1]
      %v722 = vld [vmem:[%s632 + $0x18] sm:$0xf]
      %v723 = vld [vmem:[%s632 + $0x1c] sm:$0xf]
      %v724 = vld [vmem:[%s632 + $0x20] sm:$0x1]
      %v725 = vld [vmem:[%s632 + $0x24] sm:$0xf]
      %v726 = vld [vmem:[%s632 + $0x28] sm:$0xf]
      %v727 = vld [vmem:[%s632 + $0x2c] sm:$0x1]
      %v728 = vld [vmem:[%s632 + $0x30] sm:$0xf]
      %v729 = vld [vmem:[%s632 + $0x34] sm:$0xf]
      %v730 = vld [vmem:[%s632 + $0x38] sm:$0x1]
      %v731 = vld [vmem:[%s632 + $0x3c] sm:$0xf]
      %v732 = vld [vmem:[%s632 + $0x40] sm:$0xf]
      %v733 = vld [vmem:[%s632 + $0x44] sm:$0x1]
      %v734 = vld [vmem:[%s632 + $0x48] sm:$0xf]
      %v735 = vld [vmem:[%s632 + $0x4c] sm:$0xf]
      %v736 = vld [vmem:[%s632 + $0x50] sm:$0x1]
      %v737 = vld [vmem:[%s632 + $0x54] sm:$0xf]
      %v738 = vld [vmem:[%s632 + $0x58] sm:$0xf]
      %v739 = vld [vmem:[%s632 + $0x5c] sm:$0x1]
      %v740 = vld [vmem:[%s653] sm:$0xf]
      %v741 = vld [vmem:[%s653 + $0x4] sm:$0xf]
      %v742 = vld [vmem:[%s653 + $0xc] sm:$0xf]
      %v743 = vld [vmem:[%s653 + $0x10] sm:$0xf]
      %v744 = vld [vmem:[%s653 + $0x18] sm:$0xf]
      %v745 = vld [vmem:[%s653 + $0x1c] sm:$0xf]
      %v746 = vld [vmem:[%s653 + $0x24] sm:$0xf]
      %v747 = vld [vmem:[%s653 + $0x28] sm:$0xf]
      %v748 = vld [vmem:[%s653 + $0x30] sm:$0xf]
      %v749 = vld [vmem:[%s653 + $0x34] sm:$0xf]
      %v750 = vld [vmem:[%s653 + $0x3c] sm:$0xf]
      %v751 = vld [vmem:[%s653 + $0x40] sm:$0xf]
      %v752 = vld [vmem:[%s653 + $0x48] sm:$0xf]
      %v753 = vld [vmem:[%s653 + $0x4c] sm:$0xf]
      %v754 = vld [vmem:[%s653 + $0x54] sm:$0xf]
      %v755 = vld [vmem:[%s653 + $0x58] sm:$0xf]
      %v756 = vld [vmem:[%s581] sm:$0xf]
      %v757 = vld [vmem:[%s581 + $0x4] sm:$0xf]
      %v758 = vld [vmem:[%s581 + $0x8] sm:$0x1]
      %v759 = vld [vmem:[%s615] sm:$0xf]
      %v760 = vld [vmem:[%s615 + $0x4] sm:$0xf]
      %vm761 = vsmask.f32 3328
      %vm762 = vsmask.f32 7440
      %vm763 = vmor %vm761, %vm762
      %v765 = vshrl.u32 %v676, 16
      %v767 = vrot.slane %v765, 4
      %v768 = vshll.u32 %v676, 16
      %v770 = vrot.slane %v768, 5
      %v771 = vor.u32 %v767, %v770
      %v772 = vrot.slane %v771, 4
      %v774 = vshll.u32 %v677, 16
      %v776 = vrot.slane %v774, 5
      %v777 = vsel %vm763, %v772, %v776
      %v778 = vshrl.u32 %v677, 16
      %v780 = vrot.slane %v778, 4
      %v781 = vor.u32 %v780, %v776
      %v782 = vrot.slane %v781, 4
      %v784 = vshll.u32 %v678, 16
      %v786 = vrot.slane %v784, 5
      %v787 = vsel %vm763, %v782, %v786
      %v789 = vshrl.u32 %v679, 16
      %v791 = vrot.slane %v789, 4
      %v792 = vshll.u32 %v679, 16
      %v794 = vrot.slane %v792, 5
      %v795 = vor.u32 %v791, %v794
      %v796 = vrot.slane %v795, 4
      %v798 = vshll.u32 %v680, 16
      %v800 = vrot.slane %v798, 5
      %v801 = vsel %vm763, %v796, %v800
      %v802 = vshrl.u32 %v680, 16
      %v804 = vrot.slane %v802, 4
      %v805 = vor.u32 %v804, %v800
      %v806 = vrot.slane %v805, 4
      %v808 = vshll.u32 %v681, 16
      %v810 = vrot.slane %v808, 5
      %v811 = vsel %vm763, %v806, %v810
      %v813 = vshrl.u32 %v682, 16
      %v815 = vrot.slane %v813, 4
      %v816 = vshll.u32 %v682, 16
      %v818 = vrot.slane %v816, 5
      %v819 = vor.u32 %v815, %v818
      %v820 = vrot.slane %v819, 4
      %v822 = vshll.u32 %v683, 16
      %v824 = vrot.slane %v822, 5
      %v825 = vsel %vm763, %v820, %v824
      %v826 = vshrl.u32 %v683, 16
      %v828 = vrot.slane %v826, 4
      %v829 = vor.u32 %v828, %v824
      %v830 = vrot.slane %v829, 4
      %v832 = vshll.u32 %v684, 16
      %v834 = vrot.slane %v832, 5
      %v835 = vsel %vm763, %v830, %v834
      %v837 = vshrl.u32 %v685, 16
      %v839 = vrot.slane %v837, 4
      %v840 = vshll.u32 %v685, 16
      %v842 = vrot.slane %v840, 5
      %v843 = vor.u32 %v839, %v842
      %v844 = vrot.slane %v843, 4
      %v846 = vshll.u32 %v686, 16
      %v848 = vrot.slane %v846, 5
      %v849 = vsel %vm763, %v844, %v848
      %v850 = vshrl.u32 %v686, 16
      %v852 = vrot.slane %v850, 4
      %v853 = vor.u32 %v852, %v848
      %v854 = vrot.slane %v853, 4
      %v856 = vshll.u32 %v687, 16
      %v858 = vrot.slane %v856, 5
      %v859 = vsel %vm763, %v854, %v858
      %v861 = vshrl.u32 %v688, 16
      %v863 = vrot.slane %v861, 4
      %v864 = vshll.u32 %v688, 16
      %v866 = vrot.slane %v864, 5
      %v867 = vor.u32 %v863, %v866
      %v868 = vrot.slane %v867, 4
      %v870 = vshll.u32 %v689, 16
      %v872 = vrot.slane %v870, 5
      %v873 = vsel %vm763, %v868, %v872
      %v874 = vshrl.u32 %v689, 16
      %v876 = vrot.slane %v874, 4
      %v877 = vor.u32 %v876, %v872
      %v878 = vrot.slane %v877, 4
      %v880 = vshll.u32 %v690, 16
      %v882 = vrot.slane %v880, 5
      %v883 = vsel %vm763, %v878, %v882
      %v885 = vshrl.u32 %v691, 16
      %v887 = vrot.slane %v885, 4
      %v888 = vshll.u32 %v691, 16
      %v890 = vrot.slane %v888, 5
      %v891 = vor.u32 %v887, %v890
      %v892 = vrot.slane %v891, 4
      %v894 = vshll.u32 %v692, 16
      %v896 = vrot.slane %v894, 5
      %v897 = vsel %vm763, %v892, %v896
      %v898 = vshrl.u32 %v692, 16
      %v900 = vrot.slane %v898, 4
      %v901 = vor.u32 %v900, %v896
      %v902 = vrot.slane %v901, 4
      %v904 = vshll.u32 %v693, 16
      %v906 = vrot.slane %v904, 5
      %v907 = vsel %vm763, %v902, %v906
      %v909 = vshrl.u32 %v694, 16
      %v911 = vrot.slane %v909, 4
      %v912 = vshll.u32 %v694, 16
      %v914 = vrot.slane %v912, 5
      %v915 = vor.u32 %v911, %v914
      %v916 = vrot.slane %v915, 4
      %v918 = vshll.u32 %v695, 16
      %v920 = vrot.slane %v918, 5
      %v921 = vsel %vm763, %v916, %v920
      %v922 = vshrl.u32 %v695, 16
      %v924 = vrot.slane %v922, 4
      %v925 = vor.u32 %v924, %v920
      %v926 = vrot.slane %v925, 4
      %v928 = vshll.u32 %v696, 16
      %v930 = vrot.slane %v928, 5
      %v931 = vsel %vm763, %v926, %v930
      %v933 = vshrl.u32 %v697, 16
      %v935 = vrot.slane %v933, 4
      %v936 = vshll.u32 %v697, 16
      %v938 = vrot.slane %v936, 5
      %v939 = vor.u32 %v935, %v938
      %v940 = vrot.slane %v939, 4
      %v942 = vshll.u32 %v698, 16
      %v944 = vrot.slane %v942, 5
      %v945 = vsel %vm763, %v940, %v944
      %v946 = vshrl.u32 %v698, 16
      %v948 = vrot.slane %v946, 4
      %v949 = vor.u32 %v948, %v944
      %v950 = vrot.slane %v949, 4
      %v952 = vshll.u32 %v699, 16
      %v954 = vrot.slane %v952, 5
      %v955 = vsel %vm763, %v950, %v954
      %v957 = vshrl.u32 %v716, 16
      %v959 = vrot.slane %v957, 4
      %v960 = vshll.u32 %v716, 16
      %v962 = vrot.slane %v960, 5
      %v963 = vor.u32 %v959, %v962
      %v964 = vrot.slane %v963, 4
      %v966 = vshll.u32 %v717, 16
      %v968 = vrot.slane %v966, 5
      %v969 = vsel %vm763, %v964, %v968
      %v970 = vshrl.u32 %v717, 16
      %v972 = vrot.slane %v970, 4
      %v973 = vor.u32 %v972, %v968
      %v974 = vrot.slane %v973, 4
      %v976 = vshll.u32 %v718, 16
      %v978 = vrot.slane %v976, 5
      %v979 = vsel %vm763, %v974, %v978
      %v981 = vshrl.u32 %v719, 16
      %v983 = vrot.slane %v981, 4
      %v984 = vshll.u32 %v719, 16
      %v986 = vrot.slane %v984, 5
      %v987 = vor.u32 %v983, %v986
      %v988 = vrot.slane %v987, 4
      %v990 = vshll.u32 %v720, 16
      %v992 = vrot.slane %v990, 5
      %v993 = vsel %vm763, %v988, %v992
      %v994 = vshrl.u32 %v720, 16
      %v996 = vrot.slane %v994, 4
      %v997 = vor.u32 %v996, %v992
      %v998 = vrot.slane %v997, 4
      %v1000 = vshll.u32 %v721, 16
      %v1002 = vrot.slane %v1000, 5
      %v1003 = vsel %vm763, %v998, %v1002
      %v1005 = vshrl.u32 %v722, 16
      %v1007 = vrot.slane %v1005, 4
      %v1008 = vshll.u32 %v722, 16
      %v1010 = vrot.slane %v1008, 5
      %v1011 = vor.u32 %v1007, %v1010
      %v1012 = vrot.slane %v1011, 4
      %v1014 = vshll.u32 %v723, 16
      %v1016 = vrot.slane %v1014, 5
      %v1017 = vsel %vm763, %v1012, %v1016
      %v1018 = vshrl.u32 %v723, 16
      %v1020 = vrot.slane %v1018, 4
      %v1021 = vor.u32 %v1020, %v1016
      %v1022 = vrot.slane %v1021, 4
      %v1024 = vshll.u32 %v724, 16
      %v1026 = vrot.slane %v1024, 5
      %v1027 = vsel %vm763, %v1022, %v1026
      %v1029 = vshrl.u32 %v725, 16
      %v1031 = vrot.slane %v1029, 4
      %v1032 = vshll.u32 %v725, 16
      %v1034 = vrot.slane %v1032, 5
      %v1035 = vor.u32 %v1031, %v1034
      %v1036 = vrot.slane %v1035, 4
      %v1038 = vshll.u32 %v726, 16
      %v1040 = vrot.slane %v1038, 5
      %v1041 = vsel %vm763, %v1036, %v1040
      %v1042 = vshrl.u32 %v726, 16
      %v1044 = vrot.slane %v1042, 4
      %v1045 = vor.u32 %v1044, %v1040
      %v1046 = vrot.slane %v1045, 4
      %v1048 = vshll.u32 %v727, 16
      %v1050 = vrot.slane %v1048, 5
      %v1051 = vsel %vm763, %v1046, %v1050
      %v1053 = vshrl.u32 %v728, 16
      %v1055 = vrot.slane %v1053, 4
      %v1056 = vshll.u32 %v728, 16
      %v1058 = vrot.slane %v1056, 5
      %v1059 = vor.u32 %v1055, %v1058
      %v1060 = vrot.slane %v1059, 4
      %v1062 = vshll.u32 %v729, 16
      %v1064 = vrot.slane %v1062, 5
      %v1065 = vsel %vm763, %v1060, %v1064
      %v1066 = vshrl.u32 %v729, 16
      %v1068 = vrot.slane %v1066, 4
      %v1069 = vor.u32 %v1068, %v1064
      %v1070 = vrot.slane %v1069, 4
      %v1072 = vshll.u32 %v730, 16
      %v1074 = vrot.slane %v1072, 5
      %v1075 = vsel %vm763, %v1070, %v1074
      %v1077 = vshrl.u32 %v731, 16
      %v1079 = vrot.slane %v1077, 4
      %v1080 = vshll.u32 %v731, 16
      %v1082 = vrot.slane %v1080, 5
      %v1083 = vor.u32 %v1079, %v1082
      %v1084 = vrot.slane %v1083, 4
      %v1086 = vshll.u32 %v732, 16
      %v1088 = vrot.slane %v1086, 5
      %v1089 = vsel %vm763, %v1084, %v1088
      %v1090 = vshrl.u32 %v732, 16
      %v1092 = vrot.slane %v1090, 4
      %v1093 = vor.u32 %v1092, %v1088
      %v1094 = vrot.slane %v1093, 4
      %v1096 = vshll.u32 %v733, 16
      %v1098 = vrot.slane %v1096, 5
      %v1099 = vsel %vm763, %v1094, %v1098
      %v1101 = vshrl.u32 %v734, 16
      %v1103 = vrot.slane %v1101, 4
      %v1104 = vshll.u32 %v734, 16
      %v1106 = vrot.slane %v1104, 5
      %v1107 = vor.u32 %v1103, %v1106
      %v1108 = vrot.slane %v1107, 4
      %v1110 = vshll.u32 %v735, 16
      %v1112 = vrot.slane %v1110, 5
      %v1113 = vsel %vm763, %v1108, %v1112
      %v1114 = vshrl.u32 %v735, 16
      %v1116 = vrot.slane %v1114, 4
      %v1117 = vor.u32 %v1116, %v1112
      %v1118 = vrot.slane %v1117, 4
      %v1120 = vshll.u32 %v736, 16
      %v1122 = vrot.slane %v1120, 5
      %v1123 = vsel %vm763, %v1118, %v1122
      %v1125 = vshrl.u32 %v737, 16
      %v1127 = vrot.slane %v1125, 4
      %v1128 = vshll.u32 %v737, 16
      %v1130 = vrot.slane %v1128, 5
      %v1131 = vor.u32 %v1127, %v1130
      %v1132 = vrot.slane %v1131, 4
      %v1134 = vshll.u32 %v738, 16
      %v1136 = vrot.slane %v1134, 5
      %v1137 = vsel %vm763, %v1132, %v1136
      %v1138 = vshrl.u32 %v738, 16
      %v1140 = vrot.slane %v1138, 4
      %v1141 = vor.u32 %v1140, %v1136
      %v1142 = vrot.slane %v1141, 4
      %v1144 = vshll.u32 %v739, 16
      %v1146 = vrot.slane %v1144, 5
      %v1147 = vsel %vm763, %v1142, %v1146
      %v1149 = vshrl.u32 %v756, 16
      %v1151 = vrot.slane %v1149, 4
      %v1152 = vshll.u32 %v756, 16
      %v1154 = vrot.slane %v1152, 5
      %v1155 = vor.u32 %v1151, %v1154
      %v1156 = vrot.slane %v1155, 4
      %v1158 = vshll.u32 %v757, 16
      %v1160 = vrot.slane %v1158, 5
      %v1161 = vsel %vm763, %v1156, %v1160
      %v1162 = vshrl.u32 %v757, 16
      %v1164 = vrot.slane %v1162, 4
      %v1165 = vor.u32 %v1164, %v1160
      %v1166 = vrot.slane %v1165, 4
      %v1168 = vshll.u32 %v758, 16
      %v1170 = vrot.slane %v1168, 5
      %v1171 = vsel %vm763, %v1166, %v1170
      %v1172 = vld [vmem:[%s6] sm:$0x3]
      %s1173 = scalar_lea.vmem %s6, 2
      %v1174 = vld [vmem:[%s1173] sm:$0x3]
      %v1191 = vunpack.c.l.b16 %v700
      %v1192 = vunpack.c.l.b16 %v701
      %v1193 = vunpack.c.l.b16 %v702
      %v1194 = vunpack.c.l.b16 %v703
      %v1195 = vunpack.c.l.b16 %v704
      %v1196 = vunpack.c.l.b16 %v705
      %v1197 = vunpack.c.l.b16 %v706
      %v1198 = vunpack.c.l.b16 %v707
      %v1199 = vunpack.c.l.b16 %v708
      %v1200 = vunpack.c.l.b16 %v709
      %v1201 = vunpack.c.l.b16 %v710
      %v1202 = vunpack.c.l.b16 %v711
      %v1203 = vunpack.c.l.b16 %v712
      %v1204 = vunpack.c.l.b16 %v713
      %v1205 = vunpack.c.l.b16 %v714
      %v1206 = vunpack.c.l.b16 %v715
      %v1207 = vpack.c.b16 %v1192, %v1191
      %v1208 = vpack.c.b16 %v1194, %v1193
      %v1209 = vpack.c.b16 %v1196, %v1195
      %v1210 = vpack.c.b16 %v1198, %v1197
      %v1211 = vpack.c.b16 %v1200, %v1199
      %v1212 = vpack.c.b16 %v1202, %v1201
      %v1213 = vpack.c.b16 %v1204, %v1203
      %v1214 = vpack.c.b16 %v1206, %v1205
      %vm1215 = vcmask 31744
      %v1217 = vsel %vm1215, %v1207, 0
      %v1220 = vsel %vm1215, %v1208, 0
      %v1223 = vsel %vm1215, %v1209, 0
      %v1226 = vsel %vm1215, %v1210, 0
      %v1229 = vsel %vm1215, %v1211, 0
      %v1232 = vsel %vm1215, %v1212, 0
      %v1235 = vsel %vm1215, %v1213, 0
      %v1238 = vsel %vm1215, %v1214, 0
      %vm1240 = vcmask 1041408
      %v1242 = vsel %vm1240, %v1174, 0
      %1244 = vmatpush.bf16.msra.mxu0 0
      %1245 = vmatpush.bf16.msra.mxu0 0
      %1246 = vmatpush.bf16.msra.mxu0 0
      %1247 = vmatpush.bf16.msra.mxu0 0
      %1248 = vmatpush.bf16.msra.mxu0 0
      %1249 = vmatpush.bf16.msra.mxu0 0
      %1250 = vmatpush.bf16.msra.mxu0 0
      %1251 = vmatpush.bf16.msra.mxu0 %v1242
      %1252 = vmatmul.bf16.gmra.mxu0 %v1217
      %v1253 = vpop.f32.mrf.mxu0
      %v1254 = vadd.f32 0.0, %v1253
      %v1255 = vpop.f32.mrf.mxu0
      %v1256 = vadd.f32 0.0, %v1255
      %1257 = vmatmul.bf16.gmra.mxu0 %v1220
      %v1258 = vpop.f32.mrf.mxu0
      %v1259 = vadd.f32 0.0, %v1258
      %v1260 = vpop.f32.mrf.mxu0
      %v1261 = vadd.f32 0.0, %v1260
      %1262 = vmatmul.bf16.gmra.mxu0 %v1223
      %v1263 = vpop.f32.mrf.mxu0
      %v1264 = vadd.f32 0.0, %v1263
      %v1265 = vpop.f32.mrf.mxu0
      %v1266 = vadd.f32 0.0, %v1265
      %1267 = vmatmul.bf16.gmra.mxu0 %v1226
      %v1268 = vpop.f32.mrf.mxu0
      %v1269 = vadd.f32 0.0, %v1268
      %v1270 = vpop.f32.mrf.mxu0
      %v1271 = vadd.f32 0.0, %v1270
      %1272 = vmatmul.bf16.gmra.mxu0 %v1229
      %v1273 = vpop.f32.mrf.mxu0
      %v1274 = vadd.f32 0.0, %v1273
      %v1275 = vpop.f32.mrf.mxu0
      %v1276 = vadd.f32 0.0, %v1275
      %1277 = vmatmul.bf16.gmra.mxu0 %v1232
      %v1278 = vpop.f32.mrf.mxu0
      %v1279 = vadd.f32 0.0, %v1278
      %v1280 = vpop.f32.mrf.mxu0
      %v1281 = vadd.f32 0.0, %v1280
      %1282 = vmatmul.bf16.gmra.mxu0 %v1235
      %v1283 = vpop.f32.mrf.mxu0
      %v1284 = vadd.f32 0.0, %v1283
      %v1285 = vpop.f32.mrf.mxu0
      %v1286 = vadd.f32 0.0, %v1285
      %1287 = vmatmul.bf16.gmra.mxu0 %v1238
      %v1288 = vpop.f32.mrf.mxu0
      %v1289 = vadd.f32 0.0, %v1288
      %v1290 = vpop.f32.mrf.mxu0
      %v1291 = vadd.f32 0.0, %v1290
      %1292 = vdwg.mxu0
      %v1309 = vunpack.c.l.b16 %v676
      %v1310 = vunpack.c.l.b16 %v677
      %v1311 = vunpack.c.l.b16 %v679
      %v1312 = vunpack.c.l.b16 %v680
      %v1313 = vunpack.c.l.b16 %v682
      %v1314 = vunpack.c.l.b16 %v683
      %v1315 = vunpack.c.l.b16 %v685
      %v1316 = vunpack.c.l.b16 %v686
      %v1317 = vunpack.c.l.b16 %v688
      %v1318 = vunpack.c.l.b16 %v689
      %v1319 = vunpack.c.l.b16 %v691
      %v1320 = vunpack.c.l.b16 %v692
      %v1321 = vunpack.c.l.b16 %v694
      %v1322 = vunpack.c.l.b16 %v695
      %v1323 = vunpack.c.l.b16 %v697
      %v1324 = vunpack.c.l.b16 %v698
      %v1325 = vpack.c.b16 %v1310, %v1309
      %v1326 = vpack.c.b16 %v1312, %v1311
      %v1327 = vpack.c.b16 %v1314, %v1313
      %v1328 = vpack.c.b16 %v1316, %v1315
      %v1329 = vpack.c.b16 %v1318, %v1317
      %v1330 = vpack.c.b16 %v1320, %v1319
      %v1331 = vpack.c.b16 %v1322, %v1321
      %v1332 = vpack.c.b16 %v1324, %v1323
      %v1334 = vsel %vm1215, %v1325, 0
      %v1337 = vsel %vm1215, %v1326, 0
      %v1340 = vsel %vm1215, %v1327, 0
      %v1343 = vsel %vm1215, %v1328, 0
      %v1346 = vsel %vm1215, %v1329, 0
      %v1349 = vsel %vm1215, %v1330, 0
      %v1352 = vsel %vm1215, %v1331, 0
      %v1355 = vsel %vm1215, %v1332, 0
      %v1358 = vsel %vm1240, %v1172, 0
      %1360 = vmatpush.bf16.msra.mxu0 0
      %1361 = vmatpush.bf16.msra.mxu0 0
      %1362 = vmatpush.bf16.msra.mxu0 0
      %1363 = vmatpush.bf16.msra.mxu0 0
      %1364 = vmatpush.bf16.msra.mxu0 0
      %1365 = vmatpush.bf16.msra.mxu0 0
      %1366 = vmatpush.bf16.msra.mxu0 0
      %1367 = vmatpush.bf16.msra.mxu0 %v1358
      %1368 = vmatmul.bf16.gmra.mxu0 %v1334
      %v1369 = vpop.f32.mrf.mxu0
      %v1370 = vadd.f32 %v1254, %v1369
      %v1371 = vpop.f32.mrf.mxu0
      %v1372 = vadd.f32 %v1256, %v1371
      %1373 = vmatmul.bf16.gmra.mxu0 %v1337
      %v1374 = vpop.f32.mrf.mxu0
      %v1375 = vadd.f32 %v1259, %v1374
      %v1376 = vpop.f32.mrf.mxu0
      %v1377 = vadd.f32 %v1261, %v1376
      %1378 = vmatmul.bf16.gmra.mxu0 %v1340
      %v1379 = vpop.f32.mrf.mxu0
      %v1380 = vadd.f32 %v1264, %v1379
      %v1381 = vpop.f32.mrf.mxu0
      %v1382 = vadd.f32 %v1266, %v1381
      %1383 = vmatmul.bf16.gmra.mxu0 %v1343
      %v1384 = vpop.f32.mrf.mxu0
      %v1385 = vadd.f32 %v1269, %v1384
      %v1386 = vpop.f32.mrf.mxu0
      %v1387 = vadd.f32 %v1271, %v1386
      %1388 = vmatmul.bf16.gmra.mxu0 %v1346
      %v1389 = vpop.f32.mrf.mxu0
      %v1390 = vadd.f32 %v1274, %v1389
      %v1391 = vpop.f32.mrf.mxu0
      %v1392 = vadd.f32 %v1276, %v1391
      %1393 = vmatmul.bf16.gmra.mxu0 %v1349
      %v1394 = vpop.f32.mrf.mxu0
      %v1395 = vadd.f32 %v1279, %v1394
      %v1396 = vpop.f32.mrf.mxu0
      %v1397 = vadd.f32 %v1281, %v1396
      %1398 = vmatmul.bf16.gmra.mxu0 %v1352
      %v1399 = vpop.f32.mrf.mxu0
      %v1400 = vadd.f32 %v1284, %v1399
      %v1401 = vpop.f32.mrf.mxu0
      %v1402 = vadd.f32 %v1286, %v1401
      %1403 = vmatmul.bf16.gmra.mxu0 %v1355
      %v1404 = vpop.f32.mrf.mxu0
      %v1405 = vadd.f32 %v1289, %v1404
      %v1406 = vpop.f32.mrf.mxu0
      %v1407 = vadd.f32 %v1291, %v1406
      %1408 = vdwg.mxu0
      %s1409 = scalar_lea.vmem %s6, 4
      %v1410 = vld [vmem:[%s1409] sm:$0x3]
      %v1411 = vunpack.c.l.b16 %v777
      %v1412 = vunpack.c.l.b16 %v787
      %v1413 = vunpack.c.l.b16 %v801
      %v1414 = vunpack.c.l.b16 %v811
      %v1415 = vunpack.c.l.b16 %v825
      %v1416 = vunpack.c.l.b16 %v835
      %v1417 = vunpack.c.l.b16 %v849
      %v1418 = vunpack.c.l.b16 %v859
      %v1419 = vunpack.c.l.b16 %v873
      %v1420 = vunpack.c.l.b16 %v883
      %v1421 = vunpack.c.l.b16 %v897
      %v1422 = vunpack.c.l.b16 %v907
      %v1423 = vunpack.c.l.b16 %v921
      %v1424 = vunpack.c.l.b16 %v931
      %v1425 = vunpack.c.l.b16 %v945
      %v1426 = vunpack.c.l.b16 %v955
      %v1427 = vpack.c.b16 %v1412, %v1411
      %v1428 = vpack.c.b16 %v1414, %v1413
      %v1429 = vpack.c.b16 %v1416, %v1415
      %v1430 = vpack.c.b16 %v1418, %v1417
      %v1431 = vpack.c.b16 %v1420, %v1419
      %v1432 = vpack.c.b16 %v1422, %v1421
      %v1433 = vpack.c.b16 %v1424, %v1423
      %v1434 = vpack.c.b16 %v1426, %v1425
      %v1436 = vsel %vm1215, %v1427, 0
      %v1439 = vsel %vm1215, %v1428, 0
      %v1442 = vsel %vm1215, %v1429, 0
      %v1445 = vsel %vm1215, %v1430, 0
      %v1448 = vsel %vm1215, %v1431, 0
      %v1451 = vsel %vm1215, %v1432, 0
      %v1454 = vsel %vm1215, %v1433, 0
      %v1457 = vsel %vm1215, %v1434, 0
      %v1460 = vsel %vm1240, %v1410, 0
      %1462 = vmatpush.bf16.msra.mxu0 0
      %1463 = vmatpush.bf16.msra.mxu0 0
      %1464 = vmatpush.bf16.msra.mxu0 0
      %1465 = vmatpush.bf16.msra.mxu0 0
      %1466 = vmatpush.bf16.msra.mxu0 0
      %1467 = vmatpush.bf16.msra.mxu0 0
      %1468 = vmatpush.bf16.msra.mxu0 0
      %1469 = vmatpush.bf16.msra.mxu0 %v1460
      %1470 = vmatmul.bf16.gmra.mxu0 %v1436
      %v1471 = vpop.f32.mrf.mxu0
      %v1472 = vadd.f32 0.0, %v1471
      %v1473 = vpop.f32.mrf.mxu0
      %v1474 = vadd.f32 0.0, %v1473
      %1475 = vmatmul.bf16.gmra.mxu0 %v1439
      %v1476 = vpop.f32.mrf.mxu0
      %v1477 = vadd.f32 0.0, %v1476
      %v1478 = vpop.f32.mrf.mxu0
      %v1479 = vadd.f32 0.0, %v1478
      %1480 = vmatmul.bf16.gmra.mxu0 %v1442
      %v1481 = vpop.f32.mrf.mxu0
      %v1482 = vadd.f32 0.0, %v1481
      %v1483 = vpop.f32.mrf.mxu0
      %v1484 = vadd.f32 0.0, %v1483
      %1485 = vmatmul.bf16.gmra.mxu0 %v1445
      %v1486 = vpop.f32.mrf.mxu0
      %v1487 = vadd.f32 0.0, %v1486
      %v1488 = vpop.f32.mrf.mxu0
      %v1489 = vadd.f32 0.0, %v1488
      %1490 = vmatmul.bf16.gmra.mxu0 %v1448
      %v1491 = vpop.f32.mrf.mxu0
      %v1492 = vadd.f32 0.0, %v1491
      %v1493 = vpop.f32.mrf.mxu0
      %v1494 = vadd.f32 0.0, %v1493
      %1495 = vmatmul.bf16.gmra.mxu0 %v1451
      %v1496 = vpop.f32.mrf.mxu0
      %v1497 = vadd.f32 0.0, %v1496
      %v1498 = vpop.f32.mrf.mxu0
      %v1499 = vadd.f32 0.0, %v1498
      %1500 = vmatmul.bf16.gmra.mxu0 %v1454
      %v1501 = vpop.f32.mrf.mxu0
      %v1502 = vadd.f32 0.0, %v1501
      %v1503 = vpop.f32.mrf.mxu0
      %v1504 = vadd.f32 0.0, %v1503
      %1505 = vmatmul.bf16.gmra.mxu0 %v1457
      %v1506 = vpop.f32.mrf.mxu0
      %v1507 = vadd.f32 0.0, %v1506
      %v1508 = vpop.f32.mrf.mxu0
      %v1509 = vadd.f32 0.0, %v1508
      %1510 = vdwg.mxu0
      %v1511 = vadd.f32 %v1370, %v1472
      %v1512 = vadd.f32 %v1372, %v1474
      %v1513 = vadd.f32 %v1375, %v1477
      %v1514 = vadd.f32 %v1377, %v1479
      %v1515 = vadd.f32 %v1380, %v1482
      %v1516 = vadd.f32 %v1382, %v1484
      %v1517 = vadd.f32 %v1385, %v1487
      %v1518 = vadd.f32 %v1387, %v1489
      %v1519 = vadd.f32 %v1390, %v1492
      %v1520 = vadd.f32 %v1392, %v1494
      %v1521 = vadd.f32 %v1395, %v1497
      %v1522 = vadd.f32 %v1397, %v1499
      %v1523 = vadd.f32 %v1400, %v1502
      %v1524 = vadd.f32 %v1402, %v1504
      %v1525 = vadd.f32 %v1405, %v1507
      %v1526 = vadd.f32 %v1407, %v1509
      %s1527 = scalar_lea.vmem %s6, 6
      %v1528 = vld [vmem:[%s1527] sm:$0x3]
      %v1545 = vunpack.c.l.b16 %v716
      %v1546 = vunpack.c.l.b16 %v717
      %v1547 = vunpack.c.l.b16 %v719
      %v1548 = vunpack.c.l.b16 %v720
      %v1549 = vunpack.c.l.b16 %v722
      %v1550 = vunpack.c.l.b16 %v723
      %v1551 = vunpack.c.l.b16 %v725
      %v1552 = vunpack.c.l.b16 %v726
      %v1553 = vunpack.c.l.b16 %v728
      %v1554 = vunpack.c.l.b16 %v729
      %v1555 = vunpack.c.l.b16 %v731
      %v1556 = vunpack.c.l.b16 %v732
      %v1557 = vunpack.c.l.b16 %v734
      %v1558 = vunpack.c.l.b16 %v735
      %v1559 = vunpack.c.l.b16 %v737
      %v1560 = vunpack.c.l.b16 %v738
      %v1561 = vpack.c.b16 %v1546, %v1545
      %v1562 = vpack.c.b16 %v1548, %v1547
      %v1563 = vpack.c.b16 %v1550, %v1549
      %v1564 = vpack.c.b16 %v1552, %v1551
      %v1565 = vpack.c.b16 %v1554, %v1553
      %v1566 = vpack.c.b16 %v1556, %v1555
      %v1567 = vpack.c.b16 %v1558, %v1557
      %v1568 = vpack.c.b16 %v1560, %v1559
      %v1570 = vsel %vm1215, %v1561, 0
      %v1573 = vsel %vm1215, %v1562, 0
      %v1576 = vsel %vm1215, %v1563, 0
      %v1579 = vsel %vm1215, %v1564, 0
      %v1582 = vsel %vm1215, %v1565, 0
      %v1585 = vsel %vm1215, %v1566, 0
      %v1588 = vsel %vm1215, %v1567, 0
      %v1591 = vsel %vm1215, %v1568, 0
      %v1594 = vsel %vm1240, %v1528, 0
      %1596 = vmatpush.bf16.msra.mxu0 0
      %1597 = vmatpush.bf16.msra.mxu0 0
      %1598 = vmatpush.bf16.msra.mxu0 0
      %1599 = vmatpush.bf16.msra.mxu0 0
      %1600 = vmatpush.bf16.msra.mxu0 0
      %1601 = vmatpush.bf16.msra.mxu0 0
      %1602 = vmatpush.bf16.msra.mxu0 0
      %1603 = vmatpush.bf16.msra.mxu0 %v1594
      %1604 = vmatmul.bf16.gmra.mxu0 %v1570
      %v1605 = vpop.f32.mrf.mxu0
      %v1606 = vadd.f32 0.0, %v1605
      %v1607 = vpop.f32.mrf.mxu0
      %v1608 = vadd.f32 0.0, %v1607
      %1609 = vmatmul.bf16.gmra.mxu0 %v1573
      %v1610 = vpop.f32.mrf.mxu0
      %v1611 = vadd.f32 0.0, %v1610
      %v1612 = vpop.f32.mrf.mxu0
      %v1613 = vadd.f32 0.0, %v1612
      %1614 = vmatmul.bf16.gmra.mxu0 %v1576
      %v1615 = vpop.f32.mrf.mxu0
      %v1616 = vadd.f32 0.0, %v1615
      %v1617 = vpop.f32.mrf.mxu0
      %v1618 = vadd.f32 0.0, %v1617
      %1619 = vmatmul.bf16.gmra.mxu0 %v1579
      %v1620 = vpop.f32.mrf.mxu0
      %v1621 = vadd.f32 0.0, %v1620
      %v1622 = vpop.f32.mrf.mxu0
      %v1623 = vadd.f32 0.0, %v1622
      %1624 = vmatmul.bf16.gmra.mxu0 %v1582
      %v1625 = vpop.f32.mrf.mxu0
      %v1626 = vadd.f32 0.0, %v1625
      %v1627 = vpop.f32.mrf.mxu0
      %v1628 = vadd.f32 0.0, %v1627
      %1629 = vmatmul.bf16.gmra.mxu0 %v1585
      %v1630 = vpop.f32.mrf.mxu0
      %v1631 = vadd.f32 0.0, %v1630
      %v1632 = vpop.f32.mrf.mxu0
      %v1633 = vadd.f32 0.0, %v1632
      %1634 = vmatmul.bf16.gmra.mxu0 %v1588
      %v1635 = vpop.f32.mrf.mxu0
      %v1636 = vadd.f32 0.0, %v1635
      %v1637 = vpop.f32.mrf.mxu0
      %v1638 = vadd.f32 0.0, %v1637
      %1639 = vmatmul.bf16.gmra.mxu0 %v1591
      %v1640 = vpop.f32.mrf.mxu0
      %v1641 = vadd.f32 0.0, %v1640
      %v1642 = vpop.f32.mrf.mxu0
      %v1643 = vadd.f32 0.0, %v1642
      %1644 = vdwg.mxu0
      %v1645 = vadd.f32 %v1511, %v1606
      %v1646 = vadd.f32 %v1512, %v1608
      %v1647 = vadd.f32 %v1513, %v1611
      %v1648 = vadd.f32 %v1514, %v1613
      %v1649 = vadd.f32 %v1515, %v1616
      %v1650 = vadd.f32 %v1516, %v1618
      %v1651 = vadd.f32 %v1517, %v1621
      %v1652 = vadd.f32 %v1518, %v1623
      %v1653 = vadd.f32 %v1519, %v1626
      %v1654 = vadd.f32 %v1520, %v1628
      %v1655 = vadd.f32 %v1521, %v1631
      %v1656 = vadd.f32 %v1522, %v1633
      %v1657 = vadd.f32 %v1523, %v1636
      %v1658 = vadd.f32 %v1524, %v1638
      %v1659 = vadd.f32 %v1525, %v1641
      %v1660 = vadd.f32 %v1526, %v1643
      %s1661 = scalar_lea.vmem %s6, 8
      %v1662 = vld [vmem:[%s1661] sm:$0x3]
      %v1679 = vunpack.c.l.b16 %v740
      %v1680 = vunpack.c.l.b16 %v741
      %v1681 = vunpack.c.l.b16 %v742
      %v1682 = vunpack.c.l.b16 %v743
      %v1683 = vunpack.c.l.b16 %v744
      %v1684 = vunpack.c.l.b16 %v745
      %v1685 = vunpack.c.l.b16 %v746
      %v1686 = vunpack.c.l.b16 %v747
      %v1687 = vunpack.c.l.b16 %v748
      %v1688 = vunpack.c.l.b16 %v749
      %v1689 = vunpack.c.l.b16 %v750
      %v1690 = vunpack.c.l.b16 %v751
      %v1691 = vunpack.c.l.b16 %v752
      %v1692 = vunpack.c.l.b16 %v753
      %v1693 = vunpack.c.l.b16 %v754
      %v1694 = vunpack.c.l.b16 %v755
      %v1695 = vpack.c.b16 %v1680, %v1679
      %v1696 = vpack.c.b16 %v1682, %v1681
      %v1697 = vpack.c.b16 %v1684, %v1683
      %v1698 = vpack.c.b16 %v1686, %v1685
      %v1699 = vpack.c.b16 %v1688, %v1687
      %v1700 = vpack.c.b16 %v1690, %v1689
      %v1701 = vpack.c.b16 %v1692, %v1691
      %v1702 = vpack.c.b16 %v1694, %v1693
      %v1704 = vsel %vm1215, %v1695, 0
      %v1707 = vsel %vm1215, %v1696, 0
      %v1710 = vsel %vm1215, %v1697, 0
      %v1713 = vsel %vm1215, %v1698, 0
      %v1716 = vsel %vm1215, %v1699, 0
      %v1719 = vsel %vm1215, %v1700, 0
      %v1722 = vsel %vm1215, %v1701, 0
      %v1725 = vsel %vm1215, %v1702, 0
      %v1728 = vsel %vm1240, %v1662, 0
      %1730 = vmatpush.bf16.msra.mxu0 0
      %1731 = vmatpush.bf16.msra.mxu0 0
      %1732 = vmatpush.bf16.msra.mxu0 0
      %1733 = vmatpush.bf16.msra.mxu0 0
      %1734 = vmatpush.bf16.msra.mxu0 0
      %1735 = vmatpush.bf16.msra.mxu0 0
      %1736 = vmatpush.bf16.msra.mxu0 0
      %1737 = vmatpush.bf16.msra.mxu0 %v1728
      %1738 = vmatmul.bf16.gmra.mxu0 %v1704
      %v1739 = vpop.f32.mrf.mxu0
      %v1740 = vadd.f32 0.0, %v1739
      %v1741 = vpop.f32.mrf.mxu0
      %v1742 = vadd.f32 0.0, %v1741
      %1743 = vmatmul.bf16.gmra.mxu0 %v1707
      %v1744 = vpop.f32.mrf.mxu0
      %v1745 = vadd.f32 0.0, %v1744
      %v1746 = vpop.f32.mrf.mxu0
      %v1747 = vadd.f32 0.0, %v1746
      %1748 = vmatmul.bf16.gmra.mxu0 %v1710
      %v1749 = vpop.f32.mrf.mxu0
      %v1750 = vadd.f32 0.0, %v1749
      %v1751 = vpop.f32.mrf.mxu0
      %v1752 = vadd.f32 0.0, %v1751
      %1753 = vmatmul.bf16.gmra.mxu0 %v1713
      %v1754 = vpop.f32.mrf.mxu0
      %v1755 = vadd.f32 0.0, %v1754
      %v1756 = vpop.f32.mrf.mxu0
      %v1757 = vadd.f32 0.0, %v1756
      %1758 = vmatmul.bf16.gmra.mxu0 %v1716
      %v1759 = vpop.f32.mrf.mxu0
      %v1760 = vadd.f32 0.0, %v1759
      %v1761 = vpop.f32.mrf.mxu0
      %v1762 = vadd.f32 0.0, %v1761
      %1763 = vmatmul.bf16.gmra.mxu0 %v1719
      %v1764 = vpop.f32.mrf.mxu0
      %v1765 = vadd.f32 0.0, %v1764
      %v1766 = vpop.f32.mrf.mxu0
      %v1767 = vadd.f32 0.0, %v1766
      %1768 = vmatmul.bf16.gmra.mxu0 %v1722
      %v1769 = vpop.f32.mrf.mxu0
      %v1770 = vadd.f32 0.0, %v1769
      %v1771 = vpop.f32.mrf.mxu0
      %v1772 = vadd.f32 0.0, %v1771
      %1773 = vmatmul.bf16.gmra.mxu0 %v1725
      %v1774 = vpop.f32.mrf.mxu0
      %v1775 = vadd.f32 0.0, %v1774
      %v1776 = vpop.f32.mrf.mxu0
      %v1777 = vadd.f32 0.0, %v1776
      %1778 = vdwg.mxu0
      %v1779 = vadd.f32 %v1645, %v1740
      %v1780 = vadd.f32 %v1646, %v1742
      %v1781 = vadd.f32 %v1647, %v1745
      %v1782 = vadd.f32 %v1648, %v1747
      %v1783 = vadd.f32 %v1649, %v1750
      %v1784 = vadd.f32 %v1650, %v1752
      %v1785 = vadd.f32 %v1651, %v1755
      %v1786 = vadd.f32 %v1652, %v1757
      %v1787 = vadd.f32 %v1653, %v1760
      %v1788 = vadd.f32 %v1654, %v1762
      %v1789 = vadd.f32 %v1655, %v1765
      %v1790 = vadd.f32 %v1656, %v1767
      %v1791 = vadd.f32 %v1657, %v1770
      %v1792 = vadd.f32 %v1658, %v1772
      %v1793 = vadd.f32 %v1659, %v1775
      %v1794 = vadd.f32 %v1660, %v1777
      %s1795 = scalar_lea.vmem %s6, 10
      %v1796 = vld [vmem:[%s1795] sm:$0x3]
      %v1797 = vunpack.c.l.b16 %v969
      %v1798 = vunpack.c.l.b16 %v979
      %v1799 = vunpack.c.l.b16 %v993
      %v1800 = vunpack.c.l.b16 %v1003
      %v1801 = vunpack.c.l.b16 %v1017
      %v1802 = vunpack.c.l.b16 %v1027
      %v1803 = vunpack.c.l.b16 %v1041
      %v1804 = vunpack.c.l.b16 %v1051
      %v1805 = vunpack.c.l.b16 %v1065
      %v1806 = vunpack.c.l.b16 %v1075
      %v1807 = vunpack.c.l.b16 %v1089
      %v1808 = vunpack.c.l.b16 %v1099
      %v1809 = vunpack.c.l.b16 %v1113
      %v1810 = vunpack.c.l.b16 %v1123
      %v1811 = vunpack.c.l.b16 %v1137
      %v1812 = vunpack.c.l.b16 %v1147
      %v1813 = vpack.c.b16 %v1798, %v1797
      %v1814 = vpack.c.b16 %v1800, %v1799
      %v1815 = vpack.c.b16 %v1802, %v1801
      %v1816 = vpack.c.b16 %v1804, %v1803
      %v1817 = vpack.c.b16 %v1806, %v1805
      %v1818 = vpack.c.b16 %v1808, %v1807
      %v1819 = vpack.c.b16 %v1810, %v1809
      %v1820 = vpack.c.b16 %v1812, %v1811
      %v1822 = vsel %vm1215, %v1813, 0
      %v1825 = vsel %vm1215, %v1814, 0
      %v1828 = vsel %vm1215, %v1815, 0
      %v1831 = vsel %vm1215, %v1816, 0
      %v1834 = vsel %vm1215, %v1817, 0
      %v1837 = vsel %vm1215, %v1818, 0
      %v1840 = vsel %vm1215, %v1819, 0
      %v1843 = vsel %vm1215, %v1820, 0
      %v1846 = vsel %vm1240, %v1796, 0
      %1848 = vmatpush.bf16.msra.mxu0 0
      %1849 = vmatpush.bf16.msra.mxu0 0
      %1850 = vmatpush.bf16.msra.mxu0 0
      %1851 = vmatpush.bf16.msra.mxu0 0
      %1852 = vmatpush.bf16.msra.mxu0 0
      %1853 = vmatpush.bf16.msra.mxu0 0
      %1854 = vmatpush.bf16.msra.mxu0 0
      %1855 = vmatpush.bf16.msra.mxu0 %v1846
      %1856 = vmatmul.bf16.gmra.mxu0 %v1822
      %v1857 = vpop.f32.mrf.mxu0
      %v1858 = vadd.f32 0.0, %v1857
      %v1859 = vpop.f32.mrf.mxu0
      %v1860 = vadd.f32 0.0, %v1859
      %1861 = vmatmul.bf16.gmra.mxu0 %v1825
      %v1862 = vpop.f32.mrf.mxu0
      %v1863 = vadd.f32 0.0, %v1862
      %v1864 = vpop.f32.mrf.mxu0
      %v1865 = vadd.f32 0.0, %v1864
      %1866 = vmatmul.bf16.gmra.mxu0 %v1828
      %v1867 = vpop.f32.mrf.mxu0
      %v1868 = vadd.f32 0.0, %v1867
      %v1869 = vpop.f32.mrf.mxu0
      %v1870 = vadd.f32 0.0, %v1869
      %1871 = vmatmul.bf16.gmra.mxu0 %v1831
      %v1872 = vpop.f32.mrf.mxu0
      %v1873 = vadd.f32 0.0, %v1872
      %v1874 = vpop.f32.mrf.mxu0
      %v1875 = vadd.f32 0.0, %v1874
      %1876 = vmatmul.bf16.gmra.mxu0 %v1834
      %v1877 = vpop.f32.mrf.mxu0
      %v1878 = vadd.f32 0.0, %v1877
      %v1879 = vpop.f32.mrf.mxu0
      %v1880 = vadd.f32 0.0, %v1879
      %1881 = vmatmul.bf16.gmra.mxu0 %v1837
      %v1882 = vpop.f32.mrf.mxu0
      %v1883 = vadd.f32 0.0, %v1882
      %v1884 = vpop.f32.mrf.mxu0
      %v1885 = vadd.f32 0.0, %v1884
      %1886 = vmatmul.bf16.gmra.mxu0 %v1840
      %v1887 = vpop.f32.mrf.mxu0
      %v1888 = vadd.f32 0.0, %v1887
      %v1889 = vpop.f32.mrf.mxu0
      %v1890 = vadd.f32 0.0, %v1889
      %1891 = vmatmul.bf16.gmra.mxu0 %v1843
      %v1892 = vpop.f32.mrf.mxu0
      %v1893 = vadd.f32 0.0, %v1892
      %v1894 = vpop.f32.mrf.mxu0
      %v1895 = vadd.f32 0.0, %v1894
      %1896 = vdwg.mxu0
      %v1897 = vadd.f32 %v1779, %v1858
      %v1898 = vadd.f32 %v1780, %v1860
      %v1899 = vadd.f32 %v1781, %v1863
      %v1900 = vadd.f32 %v1782, %v1865
      %v1901 = vadd.f32 %v1783, %v1868
      %v1902 = vadd.f32 %v1784, %v1870
      %v1903 = vadd.f32 %v1785, %v1873
      %v1904 = vadd.f32 %v1786, %v1875
      %v1905 = vadd.f32 %v1787, %v1878
      %v1906 = vadd.f32 %v1788, %v1880
      %v1907 = vadd.f32 %v1789, %v1883
      %v1908 = vadd.f32 %v1790, %v1885
      %v1909 = vadd.f32 %v1791, %v1888
      %v1910 = vadd.f32 %v1792, %v1890
      %v1911 = vadd.f32 %v1793, %v1893
      %v1912 = vadd.f32 %v1794, %v1895
      %s1913 = scalar_lea.vmem %s6, 12
      %v1914 = vld [vmem:[%s1913] sm:$0x3]
      %v1917 = vunpack.c.l.b16 %v756
      %v1918 = vunpack.c.l.b16 %v757
      %v1919 = vpack.c.b16 %v1918, %v1917
      %v1921 = vsel %vm1215, %v1919, 0
      %v1924 = vsel %vm1240, %v1914, 0
      %1926 = vmatpush.bf16.msra.mxu0 0
      %1927 = vmatpush.bf16.msra.mxu0 0
      %1928 = vmatpush.bf16.msra.mxu0 0
      %1929 = vmatpush.bf16.msra.mxu0 0
      %1930 = vmatpush.bf16.msra.mxu0 0
      %1931 = vmatpush.bf16.msra.mxu0 0
      %1932 = vmatpush.bf16.msra.mxu0 0
      %1933 = vmatpush.bf16.msra.mxu0 %v1924
      %1934 = vmatmul.bf16.gmra.mxu0 %v1337
      %v1935 = vpop.f32.mrf.mxu0
      %v1936 = vadd.f32 0.0, %v1935
      %v1937 = vpop.f32.mrf.mxu0
      %v1938 = vadd.f32 0.0, %v1937
      %1939 = vmatmul.bf16.gmra.mxu0 %v1340
      %v1940 = vpop.f32.mrf.mxu0
      %v1941 = vadd.f32 0.0, %v1940
      %v1942 = vpop.f32.mrf.mxu0
      %v1943 = vadd.f32 0.0, %v1942
      %1944 = vmatmul.bf16.gmra.mxu0 %v1343
      %v1945 = vpop.f32.mrf.mxu0
      %v1946 = vadd.f32 0.0, %v1945
      %v1947 = vpop.f32.mrf.mxu0
      %v1948 = vadd.f32 0.0, %v1947
      %1949 = vmatmul.bf16.gmra.mxu0 %v1346
      %v1950 = vpop.f32.mrf.mxu0
      %v1951 = vadd.f32 0.0, %v1950
      %v1952 = vpop.f32.mrf.mxu0
      %v1953 = vadd.f32 0.0, %v1952
      %1954 = vmatmul.bf16.gmra.mxu0 %v1349
      %v1955 = vpop.f32.mrf.mxu0
      %v1956 = vadd.f32 0.0, %v1955
      %v1957 = vpop.f32.mrf.mxu0
      %v1958 = vadd.f32 0.0, %v1957
      %1959 = vmatmul.bf16.gmra.mxu0 %v1352
      %v1960 = vpop.f32.mrf.mxu0
      %v1961 = vadd.f32 0.0, %v1960
      %v1962 = vpop.f32.mrf.mxu0
      %v1963 = vadd.f32 0.0, %v1962
      %1964 = vmatmul.bf16.gmra.mxu0 %v1355
      %v1965 = vpop.f32.mrf.mxu0
      %v1966 = vadd.f32 0.0, %v1965
      %v1967 = vpop.f32.mrf.mxu0
      %v1968 = vadd.f32 0.0, %v1967
      %1969 = vmatmul.bf16.gmra.mxu0 %v1921
      %v1970 = vpop.f32.mrf.mxu0
      %v1971 = vadd.f32 0.0, %v1970
      %v1972 = vpop.f32.mrf.mxu0
      %v1973 = vadd.f32 0.0, %v1972
      %1974 = vdwg.mxu0
      %v1975 = vadd.f32 %v1897, %v1936
      %v1976 = vadd.f32 %v1898, %v1938
      %v1977 = vadd.f32 %v1899, %v1941
      %v1978 = vadd.f32 %v1900, %v1943
      %v1979 = vadd.f32 %v1901, %v1946
      %v1980 = vadd.f32 %v1902, %v1948
      %v1981 = vadd.f32 %v1903, %v1951
      %v1982 = vadd.f32 %v1904, %v1953
      %v1983 = vadd.f32 %v1905, %v1956
      %v1984 = vadd.f32 %v1906, %v1958
      %v1985 = vadd.f32 %v1907, %v1961
      %v1986 = vadd.f32 %v1908, %v1963
      %v1987 = vadd.f32 %v1909, %v1966
      %v1988 = vadd.f32 %v1910, %v1968
      %v1989 = vadd.f32 %v1911, %v1971
      %v1990 = vadd.f32 %v1912, %v1973
      %s1991 = scalar_lea.vmem %s6, 14
      %v1992 = vld [vmem:[%s1991] sm:$0x3]
      %v1995 = vunpack.c.l.b16 %v759
      %v1996 = vunpack.c.l.b16 %v760
      %v1997 = vpack.c.b16 %v1996, %v1995
      %v1999 = vsel %vm1215, %v1997, 0
      %v2002 = vsel %vm1240, %v1992, 0
      %2004 = vmatpush.bf16.msra.mxu0 0
      %2005 = vmatpush.bf16.msra.mxu0 0
      %2006 = vmatpush.bf16.msra.mxu0 0
      %2007 = vmatpush.bf16.msra.mxu0 0
      %2008 = vmatpush.bf16.msra.mxu0 0
      %2009 = vmatpush.bf16.msra.mxu0 0
      %2010 = vmatpush.bf16.msra.mxu0 0
      %2011 = vmatpush.bf16.msra.mxu0 %v2002
      %2012 = vmatmul.bf16.gmra.mxu0 %v1220
      %v2013 = vpop.f32.mrf.mxu0
      %v2014 = vadd.f32 0.0, %v2013
      %v2015 = vpop.f32.mrf.mxu0
      %v2016 = vadd.f32 0.0, %v2015
      %2017 = vmatmul.bf16.gmra.mxu0 %v1223
      %v2018 = vpop.f32.mrf.mxu0
      %v2019 = vadd.f32 0.0, %v2018
      %v2020 = vpop.f32.mrf.mxu0
      %v2021 = vadd.f32 0.0, %v2020
      %2022 = vmatmul.bf16.gmra.mxu0 %v1226
      %v2023 = vpop.f32.mrf.mxu0
      %v2024 = vadd.f32 0.0, %v2023
      %v2025 = vpop.f32.mrf.mxu0
      %v2026 = vadd.f32 0.0, %v2025
      %2027 = vmatmul.bf16.gmra.mxu0 %v1229
      %v2028 = vpop.f32.mrf.mxu0
      %v2029 = vadd.f32 0.0, %v2028
      %v2030 = vpop.f32.mrf.mxu0
      %v2031 = vadd.f32 0.0, %v2030
      %2032 = vmatmul.bf16.gmra.mxu0 %v1232
      %v2033 = vpop.f32.mrf.mxu0
      %v2034 = vadd.f32 0.0, %v2033
      %v2035 = vpop.f32.mrf.mxu0
      %v2036 = vadd.f32 0.0, %v2035
      %2037 = vmatmul.bf16.gmra.mxu0 %v1235
      %v2038 = vpop.f32.mrf.mxu0
      %v2039 = vadd.f32 0.0, %v2038
      %v2040 = vpop.f32.mrf.mxu0
      %v2041 = vadd.f32 0.0, %v2040
      %2042 = vmatmul.bf16.gmra.mxu0 %v1238
      %v2043 = vpop.f32.mrf.mxu0
      %v2044 = vadd.f32 0.0, %v2043
      %v2045 = vpop.f32.mrf.mxu0
      %v2046 = vadd.f32 0.0, %v2045
      %2047 = vmatmul.bf16.gmra.mxu0 %v1999
      %v2048 = vpop.f32.mrf.mxu0
      %v2049 = vadd.f32 0.0, %v2048
      %v2050 = vpop.f32.mrf.mxu0
      %v2051 = vadd.f32 0.0, %v2050
      %2052 = vdwg.mxu0
      %v2053 = vadd.f32 %v1975, %v2014
      %v2054 = vadd.f32 %v1976, %v2016
      %v2055 = vadd.f32 %v1977, %v2019
      %v2056 = vadd.f32 %v1978, %v2021
      %v2057 = vadd.f32 %v1979, %v2024
      %v2058 = vadd.f32 %v1980, %v2026
      %v2059 = vadd.f32 %v1981, %v2029
      %v2060 = vadd.f32 %v1982, %v2031
      %v2061 = vadd.f32 %v1983, %v2034
      %v2062 = vadd.f32 %v1984, %v2036
      %v2063 = vadd.f32 %v1985, %v2039
      %v2064 = vadd.f32 %v1986, %v2041
      %v2065 = vadd.f32 %v1987, %v2044
      %v2066 = vadd.f32 %v1988, %v2046
      %v2067 = vadd.f32 %v1989, %v2049
      %v2068 = vadd.f32 %v1990, %v2051
      %s2069 = scalar_lea.vmem %s6, 16
      %v2070 = vld [vmem:[%s2069] sm:$0x3]
      %v2071 = vunpack.c.l.b16 %v1161
      %v2072 = vunpack.c.l.b16 %v1171
      %v2073 = vpack.c.b16 %v2072, %v2071
      %v2075 = vsel %vm1215, %v2073, 0
      %v2078 = vsel %vm1240, %v2070, 0
      %2080 = vmatpush.bf16.msra.mxu0 0
      %2081 = vmatpush.bf16.msra.mxu0 0
      %2082 = vmatpush.bf16.msra.mxu0 0
      %2083 = vmatpush.bf16.msra.mxu0 0
      %2084 = vmatpush.bf16.msra.mxu0 0
      %2085 = vmatpush.bf16.msra.mxu0 0
      %2086 = vmatpush.bf16.msra.mxu0 0
      %2087 = vmatpush.bf16.msra.mxu0 %v2078
      %2088 = vmatmul.bf16.gmra.mxu0 %v1439
      %v2089 = vpop.f32.mrf.mxu0
      %v2090 = vadd.f32 0.0, %v2089
      %v2091 = vpop.f32.mrf.mxu0
      %v2092 = vadd.f32 0.0, %v2091
      %2093 = vmatmul.bf16.gmra.mxu0 %v1442
      %v2094 = vpop.f32.mrf.mxu0
      %v2095 = vadd.f32 0.0, %v2094
      %v2096 = vpop.f32.mrf.mxu0
      %v2097 = vadd.f32 0.0, %v2096
      %2098 = vmatmul.bf16.gmra.mxu0 %v1445
      %v2099 = vpop.f32.mrf.mxu0
      %v2100 = vadd.f32 0.0, %v2099
      %v2101 = vpop.f32.mrf.mxu0
      %v2102 = vadd.f32 0.0, %v2101
      %2103 = vmatmul.bf16.gmra.mxu0 %v1448
      %v2104 = vpop.f32.mrf.mxu0
      %v2105 = vadd.f32 0.0, %v2104
      %v2106 = vpop.f32.mrf.mxu0
      %v2107 = vadd.f32 0.0, %v2106
      %2108 = vmatmul.bf16.gmra.mxu0 %v1451
      %v2109 = vpop.f32.mrf.mxu0
      %v2110 = vadd.f32 0.0, %v2109
      %v2111 = vpop.f32.mrf.mxu0
      %v2112 = vadd.f32 0.0, %v2111
      %2113 = vmatmul.bf16.gmra.mxu0 %v1454
      %v2114 = vpop.f32.mrf.mxu0
      %v2115 = vadd.f32 0.0, %v2114
      %v2116 = vpop.f32.mrf.mxu0
      %v2117 = vadd.f32 0.0, %v2116
      %2118 = vmatmul.bf16.gmra.mxu0 %v1457
      %v2119 = vpop.f32.mrf.mxu0
      %v2120 = vadd.f32 0.0, %v2119
      %v2121 = vpop.f32.mrf.mxu0
      %v2122 = vadd.f32 0.0, %v2121
      %2123 = vmatmul.bf16.gmra.mxu0 %v2075
      %v2124 = vpop.f32.mrf.mxu0
      %v2125 = vadd.f32 0.0, %v2124
      %v2126 = vpop.f32.mrf.mxu0
      %v2127 = vadd.f32 0.0, %v2126
      %2128 = vdwg.mxu0
      %v2129 = vadd.f32 %v2053, %v2090
      %v2130 = vadd.f32 %v2054, %v2092
      %v2131 = vadd.f32 %v2055, %v2095
      %v2132 = vadd.f32 %v2056, %v2097
      %v2133 = vadd.f32 %v2057, %v2100
      %v2134 = vadd.f32 %v2058, %v2102
      %v2135 = vadd.f32 %v2059, %v2105
      %v2136 = vadd.f32 %v2060, %v2107
      %v2137 = vadd.f32 %v2061, %v2110
      %v2138 = vadd.f32 %v2062, %v2112
      %v2139 = vadd.f32 %v2063, %v2115
      %v2140 = vadd.f32 %v2064, %v2117
      %v2141 = vadd.f32 %v2065, %v2120
      %v2142 = vadd.f32 %v2066, %v2122
      %v2143 = vadd.f32 %v2067, %v2125
      %v2144 = vadd.f32 %v2068, %v2127
      %v2145 = vpack.c.bf16 %v2129, %v2129
      %v2146 = vpack.c.bf16 %v2130, %v2130
      %v2147 = vpack.c.bf16 %v2131, %v2131
      %v2148 = vpack.c.bf16 %v2132, %v2132
      %v2149 = vpack.c.bf16 %v2133, %v2133
      %v2150 = vpack.c.bf16 %v2134, %v2134
      %v2151 = vpack.c.bf16 %v2135, %v2135
      %v2152 = vpack.c.bf16 %v2136, %v2136
      %v2153 = vpack.c.bf16 %v2137, %v2137
      %v2154 = vpack.c.bf16 %v2138, %v2138
      %v2155 = vpack.c.bf16 %v2139, %v2139
      %v2156 = vpack.c.bf16 %v2140, %v2140
      %v2157 = vpack.c.bf16 %v2141, %v2141
      %v2158 = vpack.c.bf16 %v2142, %v2142
      %v2159 = vpack.c.bf16 %v2143, %v2143
      %v2160 = vpack.c.bf16 %v2144, %v2144
      %2161 = vst [vmem:[%s665] sm:$0xf] %v2145
      %2162 = vst [vmem:[%s665 + $0x4] sm:$0xf] %v2146
      %2163 = vst [vmem:[%s665 + $0x8] sm:$0xf] %v2147
      %2164 = vst [vmem:[%s665 + $0xc] sm:$0xf] %v2148
      %2165 = vst [vmem:[%s665 + $0x10] sm:$0xf] %v2149
      %2166 = vst [vmem:[%s665 + $0x14] sm:$0xf] %v2150
      %2167 = vst [vmem:[%s665 + $0x18] sm:$0xf] %v2151
      %2168 = vst [vmem:[%s665 + $0x1c] sm:$0xf] %v2152
      %2169 = vst [vmem:[%s665 + $0x20] sm:$0xf] %v2153
      %2170 = vst [vmem:[%s665 + $0x24] sm:$0xf] %v2154
      %2171 = vst [vmem:[%s665 + $0x28] sm:$0xf] %v2155
      %2172 = vst [vmem:[%s665 + $0x2c] sm:$0xf] %v2156
      %2173 = vst [vmem:[%s665 + $0x30] sm:$0xf] %v2157
      %2174 = vst [vmem:[%s665 + $0x34] sm:$0xf] %v2158
      %2175 = vst [vmem:[%s665 + $0x38] sm:$0xf] %v2159
      %2176 = vst [vmem:[%s665 + $0x3c] sm:$0xf] %v2160
      %s2177 = smul.u32 %s25, 8
      %v2178 = vstv %s2177
      %v2179 = vadd.s32 %v2178, 1
      %v2180 = vadd.s32 %v2178, 2
      %v2181 = vadd.s32 %v2178, 3
      %v2182 = vadd.s32 %v2178, 4
      %v2183 = vadd.s32 %v2178, 5
      %v2184 = vadd.s32 %v2178, 6
      %v2185 = vadd.s32 %v2178, 7
      %v2186 = vlaneseq
      %v2187 = vshrl.u32 %v2186, 7
      %v2188 = vadd.s32 %v2187, 8
      %vm2189 = vcmp.lt.s32.totalorder %v2178, 8
      %vm2190 = vcmp.lt.s32.totalorder %v2179, 8
      %vm2191 = vcmp.lt.s32.totalorder %v2180, 8
      %vm2192 = vcmp.lt.s32.totalorder %v2181, 8
      %vm2193 = vcmp.lt.s32.totalorder %v2182, 8
      %vm2194 = vcmp.lt.s32.totalorder %v2183, 8
      %vm2195 = vcmp.lt.s32.totalorder %v2184, 8
      %vm2196 = vcmp.lt.s32.totalorder %v2185, 8
      %vm2197 = vcmp.lt.s32.totalorder %v2187, 8
      %vm2198 = vcmp.lt.s32.totalorder %v2188, 8
      %vm2199 = vmand %vm2189, %vm2197
      %vm2200 = vmand %vm2189, %vm2198
      %vm2201 = vmand %vm2190, %vm2197
      %vm2202 = vmand %vm2190, %vm2198
      %vm2203 = vmand %vm2191, %vm2197
      %vm2204 = vmand %vm2191, %vm2198
      %vm2205 = vmand %vm2192, %vm2197
      %vm2206 = vmand %vm2192, %vm2198
      %vm2207 = vmand %vm2193, %vm2197
      %vm2208 = vmand %vm2193, %vm2198
      %vm2209 = vmand %vm2194, %vm2197
      %vm2210 = vmand %vm2194, %vm2198
      %vm2211 = vmand %vm2195, %vm2197
      %vm2212 = vmand %vm2195, %vm2198
      %vm2213 = vmand %vm2196, %vm2197
      %vm2214 = vmand %vm2196, %vm2198
      %v2215 = vsel %vm2199, 1.0, 0.0
      %v2216 = vsel %vm2200, 1.0, 0.0
      %v2217 = vsel %vm2201, 1.0, 0.0
      %v2218 = vsel %vm2202, 1.0, 0.0
      %v2219 = vsel %vm2203, 1.0, 0.0
      %v2220 = vsel %vm2204, 1.0, 0.0
      %v2221 = vsel %vm2205, 1.0, 0.0
      %v2222 = vsel %vm2206, 1.0, 0.0
      %v2223 = vsel %vm2207, 1.0, 0.0
      %v2224 = vsel %vm2208, 1.0, 0.0
      %v2225 = vsel %vm2209, 1.0, 0.0
      %v2226 = vsel %vm2210, 1.0, 0.0
      %v2227 = vsel %vm2211, 1.0, 0.0
      %v2228 = vsel %vm2212, 1.0, 0.0
      %v2229 = vsel %vm2213, 1.0, 0.0
      %v2230 = vsel %vm2214, 1.0, 0.0
      %v2231 = vmul.f32 %v2129, %v2215
      %v2232 = vmul.f32 %v2130, %v2216
      %v2233 = vmul.f32 %v2131, %v2217
      %v2234 = vmul.f32 %v2132, %v2218
      %v2235 = vmul.f32 %v2133, %v2219
      %v2236 = vmul.f32 %v2134, %v2220
      %v2237 = vmul.f32 %v2135, %v2221
      %v2238 = vmul.f32 %v2136, %v2222
      %v2239 = vmul.f32 %v2137, %v2223
      %v2240 = vmul.f32 %v2138, %v2224
      %v2241 = vmul.f32 %v2139, %v2225
      %v2242 = vmul.f32 %v2140, %v2226
      %v2243 = vmul.f32 %v2141, %v2227
      %v2244 = vmul.f32 %v2142, %v2228
      %v2245 = vmul.f32 %v2143, %v2229
      %v2246 = vmul.f32 %v2144, %v2230
      %v2247 = vadd.f32 %v2231, %v2232
      %v2248 = vadd.f32 %v2247, %v2233
      %v2249 = vadd.f32 %v2248, %v2234
      %v2250 = vadd.f32 %v2249, %v2235
      %v2251 = vadd.f32 %v2250, %v2236
      %v2252 = vadd.f32 %v2251, %v2237
      %v2253 = vadd.f32 %v2252, %v2238
      %v2254 = vadd.f32 %v2253, %v2239
      %v2255 = vadd.f32 %v2254, %v2240
      %v2256 = vadd.f32 %v2255, %v2241
      %v2257 = vadd.f32 %v2256, %v2242
      %v2258 = vadd.f32 %v2257, %v2243
      %v2259 = vadd.f32 %v2258, %v2244
      %v2260 = vadd.f32 %v2259, %v2245
      %v2261 = vadd.f32 %v2260, %v2246
      %v2262 = vrot.slane %v2261, 4
      %v2263 = vadd.f32 %v2261, %v2262
      %v2264 = vrot.slane %v2263, 2
      %v2265 = vadd.f32 %v2263, %v2264
      %v2266 = vrot.slane %v2265, 1
      %v2267 = vadd.f32 %v2265, %v2266
      %2268 = vst [vmem:[%s674] sm:$0x1] %v2267
      %v2269 = vmul.f32 %v2231, %v2231
      %v2270 = vmul.f32 %v2232, %v2232
      %v2271 = vmul.f32 %v2233, %v2233
      %v2272 = vmul.f32 %v2234, %v2234
      %v2273 = vmul.f32 %v2235, %v2235
      %v2274 = vmul.f32 %v2236, %v2236
      %v2275 = vmul.f32 %v2237, %v2237
      %v2276 = vmul.f32 %v2238, %v2238
      %v2277 = vmul.f32 %v2239, %v2239
      %v2278 = vmul.f32 %v2240, %v2240
      %v2279 = vmul.f32 %v2241, %v2241
      %v2280 = vmul.f32 %v2242, %v2242
      %v2281 = vmul.f32 %v2243, %v2243
      %v2282 = vmul.f32 %v2244, %v2244
      %v2283 = vmul.f32 %v2245, %v2245
      %v2284 = vmul.f32 %v2246, %v2246
      %v2285 = vadd.f32 %v2269, %v2270
      %v2286 = vadd.f32 %v2285, %v2271
      %v2287 = vadd.f32 %v2286, %v2272
      %v2288 = vadd.f32 %v2287, %v2273
      %v2289 = vadd.f32 %v2288, %v2274
      %v2290 = vadd.f32 %v2289, %v2275
      %v2291 = vadd.f32 %v2290, %v2276
      %v2292 = vadd.f32 %v2291, %v2277
      %v2293 = vadd.f32 %v2292, %v2278
      %v2294 = vadd.f32 %v2293, %v2279
      %v2295 = vadd.f32 %v2294, %v2280
      %v2296 = vadd.f32 %v2295, %v2281
      %v2297 = vadd.f32 %v2296, %v2282
      %v2298 = vadd.f32 %v2297, %v2283
      %v2299 = vadd.f32 %v2298, %v2284
      %v2300 = vrot.slane %v2299, 4
      %v2301 = vadd.f32 %v2299, %v2300
      %v2302 = vrot.slane %v2301, 2
      %v2303 = vadd.f32 %v2301, %v2302
      %v2304 = vrot.slane %v2303, 1
      %v2305 = vadd.f32 %v2303, %v2304
      %2306 = vst [vmem:[%s674 + $0x1] sm:$0x1] %v2305
      %s2307 = sadd.s32 %s24, %s25
      %s2308 = smul.u32 16, %s2307
      %p2309 = scmp.lt.s32.totalorder %s2308, 31
      %s2310 = scalar_select %p2309, %s2308, 31
      %s2311 = smul.addr %s2310, 4
      %s2312 = scalar_lea.vmem %s7, %s2311
      %p2313 = scmp.lt.s32.totalorder %s24, 1
      %s2314 = scalar_select %p2313, %s24, 1
      %p2315 = scmp.lt.s32.totalorder %s25, 0
      %s2316 = scalar_select %p2315, %s25, 0
      %s2317 = sadd.s32 %s2316, %s2314
      %s2318 = smul.addr %s2317, 2
      %s2319 = scalar_lea.vmem %s8, %s2318
      // Predicated region
      $region49: #{downsample_forward.2} parent=47 // pred_check
        %p2320 = pneg %p249
      $region50: #{downsample_forward.2} parent=47 // pred_check_branch
        %2322 = sbr.rel (%p2320) target = $region52
      $region51: #{downsample_forward.2} parent=47 // pred_region
        %s2323 = sadd.s32 %s24, %s25
        %s2324 = smul.u32 16, %s2323
      $region52: #{downsample_forward.2} parent=47 // pred_fallthru
        _
      // Predicated region
      $region53: #{downsample_forward.2} parent=47 // pred_check
        %p2325 = pneg %p277
      $region54: #{downsample_forward.2} parent=47 // pred_check_branch
        %2327 = sbr.rel (%p2325) target = $region56
      $region55: #{downsample_forward.2} parent=47 // pred_region
        _
      $region56: #{downsample_forward.2} parent=47 // pred_fallthru
        _
    $region48: #{downsample_forward.2} parent=5 // pred_fallthru
      _
    %p2328 = scmp.le.s32.totalorder 2, %s15
    // Predicated region
    $region57: #{downsample_forward.2} parent=5 // pred_check
      %p2329 = pneg %p2328
    $region58: #{downsample_forward.2} parent=5 // pred_check_branch
      %2331 = sbr.rel (%p2329) target = $region60
    $region59: #{downsample_forward.2} parent=5 // pred_region
      %s2332 = ssub.s32 %s15, 2
      // Predicated region
      $region61: #{downsample_forward.2} parent=59 // pred_check
        %p2333 = pneg %p255
      $region62: #{downsample_forward.2} parent=59 // pred_check_branch
        %2335 = sbr.rel (%p2333) target = $region64
      $region63: #{downsample_forward.2} parent=59 // pred_region
        %s2336 = sadd.s32 %s26, %s27
        %s2337 = smul.u32 16, %s2336
        %p2338 = scmp.lt.s32.totalorder %s2337, 31
        %s2339 = scalar_select %p2338, %s2337, 31
        %s2340 = smul.addr %s2339, 4
        %s2341 = scalar_lea.vmem %s7, %s2340
      $region64: #{downsample_forward.2} parent=59 // pred_fallthru
        _
      // Predicated region
      $region65: #{downsample_forward.2} parent=59 // pred_check
        %p2342 = pneg %p283
      $region66: #{downsample_forward.2} parent=59 // pred_check_branch
        %2344 = sbr.rel (%p2342) target = $region68
      $region67: #{downsample_forward.2} parent=59 // pred_region
        %p2345 = scmp.lt.s32.totalorder %s26, 1
        %s2346 = scalar_select %p2345, %s26, 1
        %p2347 = scmp.lt.s32.totalorder %s27, 0
        %s2348 = scalar_select %p2347, %s27, 0
        %s2349 = sadd.s32 %s2348, %s2346
        %s2350 = smul.addr %s2349, 2
        %s2351 = scalar_lea.vmem %s8, %s2350
      $region68: #{downsample_forward.2} parent=59 // pred_fallthru
        _
    $region60: #{downsample_forward.2} parent=5 // pred_fallthru
      _
  $region6: #{downsample_forward.2} parent=0 // loop_footer
    %s19 = sadd.s32 1, %s15
  $region7: #{downsample_forward.2} parent=0 // loop_footer_branch
    %14 = sbr.rel target = $region3
  $region8: #{downsample_forward.2} parent=0 // loop_exit
    _

</llo_original>
